<compile_context>
chip_gen: v7x
topology: tpu7x:2x2x1
jax: 0.10.0
libtpu: 0.0.40
codegen_flags: <defaults>
</compile_context>

<pallas_src>
import math

import jax
import jax.numpy as jnp
import numpy as np
from jax import lax
from jax.experimental import pallas as pl
from jax.experimental.pallas import tpu as pltpu


def _make_recurrent_kernel(T, H, unrolled):
    """Single-invocation recurrent kernel.

    refs: g (T, B, 3H) precomputed input-side pre-activations,
          hx (B, H), w_hh_t (H, 3H) pre-transposed, b_hh (1, 3H),
          out (B, T, H), h_n (B, H).
    """

    def kernel(g_ref, hx_ref, w_hh_t_ref, b_hh_ref, out_ref, hn_ref):
        w_hh_t = w_hh_t_ref[...]                       # (H, 3H), resident
        b_hh = b_hh_ref[...]                           # (1, 3H)
        h0 = hx_ref[...].astype(jnp.float32)           # (B, H) f32 carry

        def step(t, h):
            # g already contains: [i_r + f_r + b_r_tot | i_i + f_i + b_i_tot | i_n + b_n]
            g = g_ref[t]                               # (B, 3H), leading-axis index
            gh = jnp.dot(h, w_hh_t,
                         preferred_element_type=jnp.float32) + b_hh
            r = jax.nn.sigmoid(g[:, :H] + gh[:, :H])
            z = jax.nn.sigmoid(g[:, H:2 * H] + gh[:, H:2 * H])
            n = jnp.tanh(g[:, 2 * H:] + r * gh[:, 2 * H:])
            hy = n + z * (h - n)
            out_ref[:, pl.ds(t, 1), :] = hy[:, None, :].astype(out_ref.dtype)
            return hy

        if unrolled:
            h = h0
            for t in range(T):                         # static indices, fully unrolled
                h = step(t, h)
        else:
            h = lax.fori_loop(0, T, step, h0)

        hn_ref[...] = h.astype(hn_ref.dtype)           # written exactly once

    return kernel


def gru_gcc_forward(input_feats, auxiliary_feats, hx,
                    weight_ih, weight_fh, bias_ih, bias_fh,
                    weight_hh, bias_hh):
    """Pallas implementation of GRU_with_GCC_with_shared_params.forward.

    input_feats:     (B, T, Din)
    auxiliary_feats: list of (B, T, Daux_i)
    hx:              (B, H)
    Returns (output (B, T, H), h_n (B, H)).
    """
    B, T, Din = input_feats.shape
    H = weight_hh.shape[1]
    dtype = input_feats.dtype

    # ---- Hoisted, fused input-side projection (parallel over B*T, plain XLA;
    # this work is off the serial recurrence path). ---------------------------
    x_cat = jnp.concatenate([input_feats] + list(auxiliary_feats), axis=-1)

    w_blocks = [weight_ih.T.astype(jnp.float32)]                  # (Din, 3H)
    for w in weight_fh:
        wt = w.T.astype(jnp.float32)                              # (Daux_i, 3H)
        # Only the r / i chunks of each auxiliary projection are used
        # (the third chunk of gf is discarded in the PyTorch module).
        wt = wt.at[:, 2 * H:].set(0.0)
        w_blocks.append(wt)
    w_cat = jnp.concatenate(w_blocks, axis=0)                     # (Dtot, 3H)

    b_r = bias_ih[:H] + sum([b[:H] for b in bias_fh])
    b_i = bias_ih[H:2 * H] + sum([b[H:2 * H] for b in bias_fh])
    b_n = bias_ih[2 * H:]
    b_cat = jnp.concatenate([b_r, b_i, b_n]).astype(jnp.float32)  # (3H,)

    # Time-major (T, B, 3H): the kernel indexes the cheap leading axis; the
    # layout change is fused into the matmul epilogue (no extra HBM pass).
    g = jnp.einsum('btd,dh->tbh', x_cat.astype(jnp.float32), w_cat,
                   preferred_element_type=jnp.float32) + b_cat

    w_hh_t = weight_hh.T.astype(jnp.float32)                      # (H, 3H), pre-transposed
    b_hh2 = bias_hh.reshape(1, 3 * H).astype(jnp.float32)

    # Small-T: fully unroll (static slices). Large-T: fori_loop with dynamic
    # indexing. Everything here is a few tens of KB, trivially VMEM-resident
    # on v5e/v6e/v7x.
    unrolled = T <= 64
    kernel = _make_recurrent_kernel(T, H, unrolled)

    out, h_n = pl.pallas_call(
        kernel,
        out_shape=(jax.ShapeDtypeStruct((B, T, H), dtype),
                   jax.ShapeDtypeStruct((B, H), dtype)),
        in_specs=[pl.BlockSpec(memory_space=pltpu.MemorySpace.VMEM)] * 4,
        out_specs=(pl.BlockSpec(memory_space=pltpu.MemorySpace.VMEM),
                   pl.BlockSpec(memory_space=pltpu.MemorySpace.VMEM)),
    )(g, hx, w_hh_t, b_hh2)

    return out, h_n


def gru_gcc_reference(input_feats, auxiliary_feats, hx,
                      weight_ih, weight_fh, bias_ih, bias_fh,
                      weight_hh, bias_hh):
    """Pure-JAX reference mirroring the PyTorch forward (op-for-op)."""
    B, T, _ = input_feats.shape
    H = weight_hh.shape[1]
    h = hx
    outs = []
    for t in range(T):
        x = input_feats[:, t, :]
        gi = x @ weight_ih.T + bias_ih
        gh = h @ weight_hh.T + bias_hh
        i_r, i_i, i_n = jnp.split(gi, 3, axis=1)
        h_r, h_i, h_n = jnp.split(gh, 3, axis=1)
        f_r = jnp.zeros_like(i_r)
        f_i = jnp.zeros_like(i_i)
        for a, w, b in zip(auxiliary_feats, weight_fh, bias_fh):
            gf = a[:, t, :] @ w.T + b
            tmpr, tmpi, _ = jnp.split(gf, 3, axis=1)
            f_r = f_r + tmpr
            f_i = f_i + tmpi
        r = jax.nn.sigmoid(i_r + h_r + f_r)
        z = jax.nn.sigmoid(i_i + h_i + f_i)
        n = jnp.tanh(i_n + r * h_n)
        h = n + z * (h - n)
        outs.append(h)
    return jnp.stack(outs, axis=1), h


if __name__ == "__main__":
    # Small shapes consistent with the module's forward.
    B, T = 8, 8
    input_size, hidden_size = 16, 32
    aux_dims = [16, 24]          # two auxiliary feature streams
    H = hidden_size
    stdv = 1.0 / math.sqrt(H)

    key = jax.random.PRNGKey(0)
    keys = jax.random.split(key, 16)

    # Deterministic parameter init mirroring reset_parameters() (uniform +/- stdv).
    weight_hh = jax.random.uniform(keys[0], (3 * H, H), jnp.float32, -stdv, stdv)
    bias_hh = jax.random.uniform(keys[1], (3 * H,), jnp.float32, -stdv, stdv)
    weight_ih = jax.random.uniform(keys[2], (3 * H, input_size), jnp.float32, -stdv, stdv)
    bias_ih = jax.random.uniform(keys[3], (3 * H,), jnp.float32, -stdv, stdv)
    weight_fh = [
        jax.random.uniform(keys[4], (3 * H, aux_dims[0]), jnp.float32, -stdv, stdv),
        jax.random.uniform(keys[5], (3 * H, aux_dims[1]), jnp.float32, -stdv, stdv),
    ]
    bias_fh = [
        jax.random.uniform(keys[6], (3 * H,), jnp.float32, -stdv, stdv),
        jax.random.uniform(keys[7], (3 * H,), jnp.float32, -stdv, stdv),
    ]

    # Inputs.
    input_feats = jax.random.normal(keys[8], (B, T, input_size), jnp.float32)
    auxiliary_feats = [
        jax.random.normal(keys[9], (B, T, aux_dims[0]), jnp.float32),
        jax.random.normal(keys[10], (B, T, aux_dims[1]), jnp.float32),
    ]
    hx = jax.random.normal(keys[11], (B, H), jnp.float32)

    out, h_n = gru_gcc_forward(input_feats, auxiliary_feats, hx,
                               weight_ih, weight_fh, bias_ih, bias_fh,
                               weight_hh, bias_hh)
    jax.block_until_ready((out, h_n))

    ref_out, ref_hn = gru_gcc_reference(input_feats, auxiliary_feats, hx,
                                        weight_ih, weight_fh, bias_ih, bias_fh,
                                        weight_hh, bias_hh)
    np.testing.assert_allclose(np.asarray(out), np.asarray(ref_out),
                               rtol=2e-5, atol=2e-5)
    np.testing.assert_allclose(np.asarray(h_n), np.asarray(ref_hn),
                               rtol=2e-5, atol=2e-5)
    np.testing.assert_allclose(np.asarray(h_n), np.asarray(out[:, -1, :]),
                               rtol=1e-6, atol=1e-6)

    # TODO(synk): attention=True / init=True branches (MultiHeadedAttention,
    # feats2hidden) and the avg_pool paths for weight_fh shapes != 3H are
    # unused by the provided forward() and are not lowered.
    print("KERNEL_OK")
</pallas_src>

<mosaic_0001>
module attributes {stable_mosaic.version = 11 : i64} {
  func.func @kernel(%arg0: memref<8x8x96xf32, #tpu.memory_space<vmem>>, %arg1: memref<8x32xf32, #tpu.memory_space<vmem>>, %arg2: memref<32x96xf32, #tpu.memory_space<vmem>>, %arg3: memref<1x96xf32, #tpu.memory_space<vmem>>, %arg4: memref<8x8x32xf32, #tpu.memory_space<vmem>>, %arg5: memref<8x32xf32, #tpu.memory_space<vmem>>) attributes {dimension_semantics = [], scalar_prefetch = 0 : i64, scratch_operands = 0 : i64, tpu.core_type = #tpu.core_type<tc>} {
    %c0 = arith.constant 0 : index
    %c0_0 = arith.constant 0 : index
    %0 = vector.load %arg2[%c0, %c0_0] : memref<32x96xf32, #tpu.memory_space<vmem>>, vector<32x96xf32>
    %c0_1 = arith.constant 0 : index
    %c0_2 = arith.constant 0 : index
    %1 = vector.load %arg3[%c0_1, %c0_2] : memref<1x96xf32, #tpu.memory_space<vmem>>, vector<1x96xf32>
    %c0_3 = arith.constant 0 : index
    %c0_4 = arith.constant 0 : index
    %2 = vector.load %arg1[%c0_3, %c0_4] : memref<8x32xf32, #tpu.memory_space<vmem>>, vector<8x32xf32>
    %c0_5 = arith.constant 0 : index
    %c0_6 = arith.constant 0 : index
    %c0_7 = arith.constant 0 : index
    %3 = vector.load %arg0[%c0_5, %c0_6, %c0_7] : memref<8x8x96xf32, #tpu.memory_space<vmem>>, vector<1x8x96xf32>
    %4 = vector.shape_cast %3 : vector<1x8x96xf32> to vector<8x96xf32>
    %cst = arith.constant dense<0.000000e+00> : vector<8x96xf32>
    %5 = tpu.matmul %2, %0, %cst {dimension_numbers = #tpu.dot_dimension_numbers<[1], [0], [0], [1], [0, 0, 1, 1], [], []>} : vector<8x32xf32>, vector<32x96xf32>, vector<8x96xf32> -> vector<8x96xf32>
    %6 = vector.broadcast %1 : vector<1x96xf32> to vector<8x96xf32>
    %7 = arith.addf %5, %6 : vector<8x96xf32>
    %8 = vector.extract_strided_slice %4 {offsets = [0, 0], sizes = [8, 32], strides = [1, 1]} : vector<8x96xf32> to vector<8x32xf32>
    %9 = vector.extract_strided_slice %7 {offsets = [0, 0], sizes = [8, 32], strides = [1, 1]} : vector<8x96xf32> to vector<8x32xf32>
    %10 = arith.addf %8, %9 : vector<8x32xf32>
    %11 = arith.negf %10 : vector<8x32xf32>
    %12 = math.exp %11 : vector<8x32xf32>
    %cst_8 = arith.constant 1.000000e+00 : f32
    %13 = vector.broadcast %cst_8 : f32 to vector<8x32xf32>
    %14 = arith.addf %13, %12 : vector<8x32xf32>
    %15 = arith.divf %13, %14 : vector<8x32xf32>
    %16 = vector.extract_strided_slice %4 {offsets = [0, 32], sizes = [8, 32], strides = [1, 1]} : vector<8x96xf32> to vector<8x32xf32>
    %17 = vector.extract_strided_slice %7 {offsets = [0, 32], sizes = [8, 32], strides = [1, 1]} : vector<8x96xf32> to vector<8x32xf32>
    %18 = arith.addf %16, %17 : vector<8x32xf32>
    %19 = arith.negf %18 : vector<8x32xf32>
    %20 = math.exp %19 : vector<8x32xf32>
    %cst_9 = arith.constant 1.000000e+00 : f32
    %21 = vector.broadcast %cst_9 : f32 to vector<8x32xf32>
    %22 = arith.addf %21, %20 : vector<8x32xf32>
    %23 = arith.divf %21, %22 : vector<8x32xf32>
    %24 = vector.extract_strided_slice %4 {offsets = [0, 64], sizes = [8, 32], strides = [1, 1]} : vector<8x96xf32> to vector<8x32xf32>
    %25 = vector.extract_strided_slice %7 {offsets = [0, 64], sizes = [8, 32], strides = [1, 1]} : vector<8x96xf32> to vector<8x32xf32>
    %26 = arith.mulf %15, %25 : vector<8x32xf32>
    %27 = arith.addf %24, %26 : vector<8x32xf32>
    %28 = math.tanh %27 : vector<8x32xf32>
    %29 = arith.subf %2, %28 : vector<8x32xf32>
    %30 = arith.mulf %23, %29 : vector<8x32xf32>
    %31 = arith.addf %28, %30 : vector<8x32xf32>
    %32 = vector.shape_cast %31 : vector<8x32xf32> to vector<8x1x32xf32>
    %c0_10 = arith.constant 0 : index
    %c0_11 = arith.constant 0 : index
    %c0_12 = arith.constant 0 : index
    %33 = vector.load %arg4[%c0_10, %c0_11, %c0_12] : memref<8x8x32xf32, #tpu.memory_space<vmem>>, vector<8x1x32xf32>
    tpu.vector_store %arg4[%c0_10, %c0_11, %c0_12], %32 {strides = array<i32>} : memref<8x8x32xf32, #tpu.memory_space<vmem>>, vector<8x1x32xf32>,
    %c1 = arith.constant 1 : index
    %c0_13 = arith.constant 0 : index
    %c0_14 = arith.constant 0 : index
    %34 = vector.load %arg0[%c1, %c0_13, %c0_14] : memref<8x8x96xf32, #tpu.memory_space<vmem>>, vector<1x8x96xf32>
    %35 = vector.shape_cast %34 : vector<1x8x96xf32> to vector<8x96xf32>
    %cst_15 = arith.constant dense<0.000000e+00> : vector<8x96xf32>
    %36 = tpu.matmul %31, %0, %cst_15 {dimension_numbers = #tpu.dot_dimension_numbers<[1], [0], [0], [1], [0, 0, 1, 1], [], []>} : vector<8x32xf32>, vector<32x96xf32>, vector<8x96xf32> -> vector<8x96xf32>
    %37 = vector.broadcast %1 : vector<1x96xf32> to vector<8x96xf32>
    %38 = arith.addf %36, %37 : vector<8x96xf32>
    %39 = vector.extract_strided_slice %35 {offsets = [0, 0], sizes = [8, 32], strides = [1, 1]} : vector<8x96xf32> to vector<8x32xf32>
    %40 = vector.extract_strided_slice %38 {offsets = [0, 0], sizes = [8, 32], strides = [1, 1]} : vector<8x96xf32> to vector<8x32xf32>
    %41 = arith.addf %39, %40 : vector<8x32xf32>
    %42 = arith.negf %41 : vector<8x32xf32>
    %43 = math.exp %42 : vector<8x32xf32>
    %cst_16 = arith.constant 1.000000e+00 : f32
    %44 = vector.broadcast %cst_16 : f32 to vector<8x32xf32>
    %45 = arith.addf %44, %43 : vector<8x32xf32>
    %46 = arith.divf %44, %45 : vector<8x32xf32>
    %47 = vector.extract_strided_slice %35 {offsets = [0, 32], sizes = [8, 32], strides = [1, 1]} : vector<8x96xf32> to vector<8x32xf32>
    %48 = vector.extract_strided_slice %38 {offsets = [0, 32], sizes = [8, 32], strides = [1, 1]} : vector<8x96xf32> to vector<8x32xf32>
    %49 = arith.addf %47, %48 : vector<8x32xf32>
    %50 = arith.negf %49 : vector<8x32xf32>
    %51 = math.exp %50 : vector<8x32xf32>
    %cst_17 = arith.constant 1.000000e+00 : f32
    %52 = vector.broadcast %cst_17 : f32 to vector<8x32xf32>
    %53 = arith.addf %52, %51 : vector<8x32xf32>
    %54 = arith.divf %52, %53 : vector<8x32xf32>
    %55 = vector.extract_strided_slice %35 {offsets = [0, 64], sizes = [8, 32], strides = [1, 1]} : vector<8x96xf32> to vector<8x32xf32>
    %56 = vector.extract_strided_slice %38 {offsets = [0, 64], sizes = [8, 32], strides = [1, 1]} : vector<8x96xf32> to vector<8x32xf32>
    %57 = arith.mulf %46, %56 : vector<8x32xf32>
    %58 = arith.addf %55, %57 : vector<8x32xf32>
    %59 = math.tanh %58 : vector<8x32xf32>
    %60 = arith.subf %31, %59 : vector<8x32xf32>
    %61 = arith.mulf %54, %60 : vector<8x32xf32>
    %62 = arith.addf %59, %61 : vector<8x32xf32>
    %63 = vector.shape_cast %62 : vector<8x32xf32> to vector<8x1x32xf32>
    %c0_18 = arith.constant 0 : index
    %c1_19 = arith.constant 1 : index
    %c0_20 = arith.constant 0 : index
    %64 = vector.load %arg4[%c0_18, %c1_19, %c0_20] : memref<8x8x32xf32, #tpu.memory_space<vmem>>, vector<8x1x32xf32>
    tpu.vector_store %arg4[%c0_18, %c1_19, %c0_20], %63 {strides = array<i32>} : memref<8x8x32xf32, #tpu.memory_space<vmem>>, vector<8x1x32xf32>,
    %c2 = arith.constant 2 : index
    %c0_21 = arith.constant 0 : index
    %c0_22 = arith.constant 0 : index
    %65 = vector.load %arg0[%c2, %c0_21, %c0_22] : memref<8x8x96xf32, #tpu.memory_space<vmem>>, vector<1x8x96xf32>
    %66 = vector.shape_cast %65 : vector<1x8x96xf32> to vector<8x96xf32>
    %cst_23 = arith.constant dense<0.000000e+00> : vector<8x96xf32>
    %67 = tpu.matmul %62, %0, %cst_23 {dimension_numbers = #tpu.dot_dimension_numbers<[1], [0], [0], [1], [0, 0, 1, 1], [], []>} : vector<8x32xf32>, vector<32x96xf32>, vector<8x96xf32> -> vector<8x96xf32>
    %68 = vector.broadcast %1 : vector<1x96xf32> to vector<8x96xf32>
    %69 = arith.addf %67, %68 : vector<8x96xf32>
    %70 = vector.extract_strided_slice %66 {offsets = [0, 0], sizes = [8, 32], strides = [1, 1]} : vector<8x96xf32> to vector<8x32xf32>
    %71 = vector.extract_strided_slice %69 {offsets = [0, 0], sizes = [8, 32], strides = [1, 1]} : vector<8x96xf32> to vector<8x32xf32>
    %72 = arith.addf %70, %71 : vector<8x32xf32>
    %73 = arith.negf %72 : vector<8x32xf32>
    %74 = math.exp %73 : vector<8x32xf32>
    %cst_24 = arith.constant 1.000000e+00 : f32
    %75 = vector.broadcast %cst_24 : f32 to vector<8x32xf32>
    %76 = arith.addf %75, %74 : vector<8x32xf32>
    %77 = arith.divf %75, %76 : vector<8x32xf32>
    %78 = vector.extract_strided_slice %66 {offsets = [0, 32], sizes = [8, 32], strides = [1, 1]} : vector<8x96xf32> to vector<8x32xf32>
    %79 = vector.extract_strided_slice %69 {offsets = [0, 32], sizes = [8, 32], strides = [1, 1]} : vector<8x96xf32> to vector<8x32xf32>
    %80 = arith.addf %78, %79 : vector<8x32xf32>
    %81 = arith.negf %80 : vector<8x32xf32>
    %82 = math.exp %81 : vector<8x32xf32>
    %cst_25 = arith.constant 1.000000e+00 : f32
    %83 = vector.broadcast %cst_25 : f32 to vector<8x32xf32>
    %84 = arith.addf %83, %82 : vector<8x32xf32>
    %85 = arith.divf %83, %84 : vector<8x32xf32>
    %86 = vector.extract_strided_slice %66 {offsets = [0, 64], sizes = [8, 32], strides = [1, 1]} : vector<8x96xf32> to vector<8x32xf32>
    %87 = vector.extract_strided_slice %69 {offsets = [0, 64], sizes = [8, 32], strides = [1, 1]} : vector<8x96xf32> to vector<8x32xf32>
    %88 = arith.mulf %77, %87 : vector<8x32xf32>
    %89 = arith.addf %86, %88 : vector<8x32xf32>
    %90 = math.tanh %89 : vector<8x32xf32>
    %91 = arith.subf %62, %90 : vector<8x32xf32>
    %92 = arith.mulf %85, %91 : vector<8x32xf32>
    %93 = arith.addf %90, %92 : vector<8x32xf32>
    %94 = vector.shape_cast %93 : vector<8x32xf32> to vector<8x1x32xf32>
    %c0_26 = arith.constant 0 : index
    %c2_27 = arith.constant 2 : index
    %c0_28 = arith.constant 0 : index
    %95 = vector.load %arg4[%c0_26, %c2_27, %c0_28] : memref<8x8x32xf32, #tpu.memory_space<vmem>>, vector<8x1x32xf32>
    tpu.vector_store %arg4[%c0_26, %c2_27, %c0_28], %94 {strides = array<i32>} : memref<8x8x32xf32, #tpu.memory_space<vmem>>, vector<8x1x32xf32>,
    %c3 = arith.constant 3 : index
    %c0_29 = arith.constant 0 : index
    %c0_30 = arith.constant 0 : index
    %96 = vector.load %arg0[%c3, %c0_29, %c0_30] : memref<8x8x96xf32, #tpu.memory_space<vmem>>, vector<1x8x96xf32>
    %97 = vector.shape_cast %96 : vector<1x8x96xf32> to vector<8x96xf32>
    %cst_31 = arith.constant dense<0.000000e+00> : vector<8x96xf32>
    %98 = tpu.matmul %93, %0, %cst_31 {dimension_numbers = #tpu.dot_dimension_numbers<[1], [0], [0], [1], [0, 0, 1, 1], [], []>} : vector<8x32xf32>, vector<32x96xf32>, vector<8x96xf32> -> vector<8x96xf32>
    %99 = vector.broadcast %1 : vector<1x96xf32> to vector<8x96xf32>
    %100 = arith.addf %98, %99 : vector<8x96xf32>
    %101 = vector.extract_strided_slice %97 {offsets = [0, 0], sizes = [8, 32], strides = [1, 1]} : vector<8x96xf32> to vector<8x32xf32>
    %102 = vector.extract_strided_slice %100 {offsets = [0, 0], sizes = [8, 32], strides = [1, 1]} : vector<8x96xf32> to vector<8x32xf32>
    %103 = arith.addf %101, %102 : vector<8x32xf32>
    %104 = arith.negf %103 : vector<8x32xf32>
    %105 = math.exp %104 : vector<8x32xf32>
    %cst_32 = arith.constant 1.000000e+00 : f32
    %106 = vector.broadcast %cst_32 : f32 to vector<8x32xf32>
    %107 = arith.addf %106, %105 : vector<8x32xf32>
    %108 = arith.divf %106, %107 : vector<8x32xf32>
    %109 = vector.extract_strided_slice %97 {offsets = [0, 32], sizes = [8, 32], strides = [1, 1]} : vector<8x96xf32> to vector<8x32xf32>
    %110 = vector.extract_strided_slice %100 {offsets = [0, 32], sizes = [8, 32], strides = [1, 1]} : vector<8x96xf32> to vector<8x32xf32>
    %111 = arith.addf %109, %110 : vector<8x32xf32>
    %112 = arith.negf %111 : vector<8x32xf32>
    %113 = math.exp %112 : vector<8x32xf32>
    %cst_33 = arith.constant 1.000000e+00 : f32
    %114 = vector.broadcast %cst_33 : f32 to vector<8x32xf32>
    %115 = arith.addf %114, %113 : vector<8x32xf32>
    %116 = arith.divf %114, %115 : vector<8x32xf32>
    %117 = vector.extract_strided_slice %97 {offsets = [0, 64], sizes = [8, 32], strides = [1, 1]} : vector<8x96xf32> to vector<8x32xf32>
    %118 = vector.extract_strided_slice %100 {offsets = [0, 64], sizes = [8, 32], strides = [1, 1]} : vector<8x96xf32> to vector<8x32xf32>
    %119 = arith.mulf %108, %118 : vector<8x32xf32>
    %120 = arith.addf %117, %119 : vector<8x32xf32>
    %121 = math.tanh %120 : vector<8x32xf32>
    %122 = arith.subf %93, %121 : vector<8x32xf32>
    %123 = arith.mulf %116, %122 : vector<8x32xf32>
    %124 = arith.addf %121, %123 : vector<8x32xf32>
    %125 = vector.shape_cast %124 : vector<8x32xf32> to vector<8x1x32xf32>
    %c0_34 = arith.constant 0 : index
    %c3_35 = arith.constant 3 : index
    %c0_36 = arith.constant 0 : index
    %126 = vector.load %arg4[%c0_34, %c3_35, %c0_36] : memref<8x8x32xf32, #tpu.memory_space<vmem>>, vector<8x1x32xf32>
    tpu.vector_store %arg4[%c0_34, %c3_35, %c0_36], %125 {strides = array<i32>} : memref<8x8x32xf32, #tpu.memory_space<vmem>>, vector<8x1x32xf32>,
    %c4 = arith.constant 4 : index
    %c0_37 = arith.constant 0 : index
    %c0_38 = arith.constant 0 : index
    %127 = vector.load %arg0[%c4, %c0_37, %c0_38] : memref<8x8x96xf32, #tpu.memory_space<vmem>>, vector<1x8x96xf32>
    %128 = vector.shape_cast %127 : vector<1x8x96xf32> to vector<8x96xf32>
    %cst_39 = arith.constant dense<0.000000e+00> : vector<8x96xf32>
    %129 = tpu.matmul %124, %0, %cst_39 {dimension_numbers = #tpu.dot_dimension_numbers<[1], [0], [0], [1], [0, 0, 1, 1], [], []>} : vector<8x32xf32>, vector<32x96xf32>, vector<8x96xf32> -> vector<8x96xf32>
    %130 = vector.broadcast %1 : vector<1x96xf32> to vector<8x96xf32>
    %131 = arith.addf %129, %130 : vector<8x96xf32>
    %132 = vector.extract_strided_slice %128 {offsets = [0, 0], sizes = [8, 32], strides = [1, 1]} : vector<8x96xf32> to vector<8x32xf32>
    %133 = vector.extract_strided_slice %131 {offsets = [0, 0], sizes = [8, 32], strides = [1, 1]} : vector<8x96xf32> to vector<8x32xf32>
    %134 = arith.addf %132, %133 : vector<8x32xf32>
    %135 = arith.negf %134 : vector<8x32xf32>
    %136 = math.exp %135 : vector<8x32xf32>
    %cst_40 = arith.constant 1.000000e+00 : f32
    %137 = vector.broadcast %cst_40 : f32 to vector<8x32xf32>
    %138 = arith.addf %137, %136 : vector<8x32xf32>
    %139 = arith.divf %137, %138 : vector<8x32xf32>
    %140 = vector.extract_strided_slice %128 {offsets = [0, 32], sizes = [8, 32], strides = [1, 1]} : vector<8x96xf32> to vector<8x32xf32>
    %141 = vector.extract_strided_slice %131 {offsets = [0, 32], sizes = [8, 32], strides = [1, 1]} : vector<8x96xf32> to vector<8x32xf32>
    %142 = arith.addf %140, %141 : vector<8x32xf32>
    %143 = arith.negf %142 : vector<8x32xf32>
    %144 = math.exp %143 : vector<8x32xf32>
    %cst_41 = arith.constant 1.000000e+00 : f32
    %145 = vector.broadcast %cst_41 : f32 to vector<8x32xf32>
    %146 = arith.addf %145, %144 : vector<8x32xf32>
    %147 = arith.divf %145, %146 : vector<8x32xf32>
    %148 = vector.extract_strided_slice %128 {offsets = [0, 64], sizes = [8, 32], strides = [1, 1]} : vector<8x96xf32> to vector<8x32xf32>
    %149 = vector.extract_strided_slice %131 {offsets = [0, 64], sizes = [8, 32], strides = [1, 1]} : vector<8x96xf32> to vector<8x32xf32>
    %150 = arith.mulf %139, %149 : vector<8x32xf32>
    %151 = arith.addf %148, %150 : vector<8x32xf32>
    %152 = math.tanh %151 : vector<8x32xf32>
    %153 = arith.subf %124, %152 : vector<8x32xf32>
    %154 = arith.mulf %147, %153 : vector<8x32xf32>
    %155 = arith.addf %152, %154 : vector<8x32xf32>
    %156 = vector.shape_cast %155 : vector<8x32xf32> to vector<8x1x32xf32>
    %c0_42 = arith.constant 0 : index
    %c4_43 = arith.constant 4 : index
    %c0_44 = arith.constant 0 : index
    %157 = vector.load %arg4[%c0_42, %c4_43, %c0_44] : memref<8x8x32xf32, #tpu.memory_space<vmem>>, vector<8x1x32xf32>
    tpu.vector_store %arg4[%c0_42, %c4_43, %c0_44], %156 {strides = array<i32>} : memref<8x8x32xf32, #tpu.memory_space<vmem>>, vector<8x1x32xf32>,
    %c5 = arith.constant 5 : index
    %c0_45 = arith.constant 0 : index
    %c0_46 = arith.constant 0 : index
    %158 = vector.load %arg0[%c5, %c0_45, %c0_46] : memref<8x8x96xf32, #tpu.memory_space<vmem>>, vector<1x8x96xf32>
    %159 = vector.shape_cast %158 : vector<1x8x96xf32> to vector<8x96xf32>
    %cst_47 = arith.constant dense<0.000000e+00> : vector<8x96xf32>
    %160 = tpu.matmul %155, %0, %cst_47 {dimension_numbers = #tpu.dot_dimension_numbers<[1], [0], [0], [1], [0, 0, 1, 1], [], []>} : vector<8x32xf32>, vector<32x96xf32>, vector<8x96xf32> -> vector<8x96xf32>
    %161 = vector.broadcast %1 : vector<1x96xf32> to vector<8x96xf32>
    %162 = arith.addf %160, %161 : vector<8x96xf32>
    %163 = vector.extract_strided_slice %159 {offsets = [0, 0], sizes = [8, 32], strides = [1, 1]} : vector<8x96xf32> to vector<8x32xf32>
    %164 = vector.extract_strided_slice %162 {offsets = [0, 0], sizes = [8, 32], strides = [1, 1]} : vector<8x96xf32> to vector<8x32xf32>
    %165 = arith.addf %163, %164 : vector<8x32xf32>
    %166 = arith.negf %165 : vector<8x32xf32>
    %167 = math.exp %166 : vector<8x32xf32>
    %cst_48 = arith.constant 1.000000e+00 : f32
    %168 = vector.broadcast %cst_48 : f32 to vector<8x32xf32>
    %169 = arith.addf %168, %167 : vector<8x32xf32>
    %170 = arith.divf %168, %169 : vector<8x32xf32>
    %171 = vector.extract_strided_slice %159 {offsets = [0, 32], sizes = [8, 32], strides = [1, 1]} : vector<8x96xf32> to vector<8x32xf32>
    %172 = vector.extract_strided_slice %162 {offsets = [0, 32], sizes = [8, 32], strides = [1, 1]} : vector<8x96xf32> to vector<8x32xf32>
    %173 = arith.addf %171, %172 : vector<8x32xf32>
    %174 = arith.negf %173 : vector<8x32xf32>
    %175 = math.exp %174 : vector<8x32xf32>
    %cst_49 = arith.constant 1.000000e+00 : f32
    %176 = vector.broadcast %cst_49 : f32 to vector<8x32xf32>
    %177 = arith.addf %176, %175 : vector<8x32xf32>
    %178 = arith.divf %176, %177 : vector<8x32xf32>
    %179 = vector.extract_strided_slice %159 {offsets = [0, 64], sizes = [8, 32], strides = [1, 1]} : vector<8x96xf32> to vector<8x32xf32>
    %180 = vector.extract_strided_slice %162 {offsets = [0, 64], sizes = [8, 32], strides = [1, 1]} : vector<8x96xf32> to vector<8x32xf32>
    %181 = arith.mulf %170, %180 : vector<8x32xf32>
    %182 = arith.addf %179, %181 : vector<8x32xf32>
    %183 = math.tanh %182 : vector<8x32xf32>
    %184 = arith.subf %155, %183 : vector<8x32xf32>
    %185 = arith.mulf %178, %184 : vector<8x32xf32>
    %186 = arith.addf %183, %185 : vector<8x32xf32>
    %187 = vector.shape_cast %186 : vector<8x32xf32> to vector<8x1x32xf32>
    %c0_50 = arith.constant 0 : index
    %c5_51 = arith.constant 5 : index
    %c0_52 = arith.constant 0 : index
    %188 = vector.load %arg4[%c0_50, %c5_51, %c0_52] : memref<8x8x32xf32, #tpu.memory_space<vmem>>, vector<8x1x32xf32>
    tpu.vector_store %arg4[%c0_50, %c5_51, %c0_52], %187 {strides = array<i32>} : memref<8x8x32xf32, #tpu.memory_space<vmem>>, vector<8x1x32xf32>,
    %c6 = arith.constant 6 : index
    %c0_53 = arith.constant 0 : index
    %c0_54 = arith.constant 0 : index
    %189 = vector.load %arg0[%c6, %c0_53, %c0_54] : memref<8x8x96xf32, #tpu.memory_space<vmem>>, vector<1x8x96xf32>
    %190 = vector.shape_cast %189 : vector<1x8x96xf32> to vector<8x96xf32>
    %cst_55 = arith.constant dense<0.000000e+00> : vector<8x96xf32>
    %191 = tpu.matmul %186, %0, %cst_55 {dimension_numbers = #tpu.dot_dimension_numbers<[1], [0], [0], [1], [0, 0, 1, 1], [], []>} : vector<8x32xf32>, vector<32x96xf32>, vector<8x96xf32> -> vector<8x96xf32>
    %192 = vector.broadcast %1 : vector<1x96xf32> to vector<8x96xf32>
    %193 = arith.addf %191, %192 : vector<8x96xf32>
    %194 = vector.extract_strided_slice %190 {offsets = [0, 0], sizes = [8, 32], strides = [1, 1]} : vector<8x96xf32> to vector<8x32xf32>
    %195 = vector.extract_strided_slice %193 {offsets = [0, 0], sizes = [8, 32], strides = [1, 1]} : vector<8x96xf32> to vector<8x32xf32>
    %196 = arith.addf %194, %195 : vector<8x32xf32>
    %197 = arith.negf %196 : vector<8x32xf32>
    %198 = math.exp %197 : vector<8x32xf32>
    %cst_56 = arith.constant 1.000000e+00 : f32
    %199 = vector.broadcast %cst_56 : f32 to vector<8x32xf32>
    %200 = arith.addf %199, %198 : vector<8x32xf32>
    %201 = arith.divf %199, %200 : vector<8x32xf32>
    %202 = vector.extract_strided_slice %190 {offsets = [0, 32], sizes = [8, 32], strides = [1, 1]} : vector<8x96xf32> to vector<8x32xf32>
    %203 = vector.extract_strided_slice %193 {offsets = [0, 32], sizes = [8, 32], strides = [1, 1]} : vector<8x96xf32> to vector<8x32xf32>
    %204 = arith.addf %202, %203 : vector<8x32xf32>
    %205 = arith.negf %204 : vector<8x32xf32>
    %206 = math.exp %205 : vector<8x32xf32>
    %cst_57 = arith.constant 1.000000e+00 : f32
    %207 = vector.broadcast %cst_57 : f32 to vector<8x32xf32>
    %208 = arith.addf %207, %206 : vector<8x32xf32>
    %209 = arith.divf %207, %208 : vector<8x32xf32>
    %210 = vector.extract_strided_slice %190 {offsets = [0, 64], sizes = [8, 32], strides = [1, 1]} : vector<8x96xf32> to vector<8x32xf32>
    %211 = vector.extract_strided_slice %193 {offsets = [0, 64], sizes = [8, 32], strides = [1, 1]} : vector<8x96xf32> to vector<8x32xf32>
    %212 = arith.mulf %201, %211 : vector<8x32xf32>
    %213 = arith.addf %210, %212 : vector<8x32xf32>
    %214 = math.tanh %213 : vector<8x32xf32>
    %215 = arith.subf %186, %214 : vector<8x32xf32>
    %216 = arith.mulf %209, %215 : vector<8x32xf32>
    %217 = arith.addf %214, %216 : vector<8x32xf32>
    %218 = vector.shape_cast %217 : vector<8x32xf32> to vector<8x1x32xf32>
    %c0_58 = arith.constant 0 : index
    %c6_59 = arith.constant 6 : index
    %c0_60 = arith.constant 0 : index
    %219 = vector.load %arg4[%c0_58, %c6_59, %c0_60] : memref<8x8x32xf32, #tpu.memory_space<vmem>>, vector<8x1x32xf32>
    tpu.vector_store %arg4[%c0_58, %c6_59, %c0_60], %218 {strides = array<i32>} : memref<8x8x32xf32, #tpu.memory_space<vmem>>, vector<8x1x32xf32>,
    %c7 = arith.constant 7 : index
    %c0_61 = arith.constant 0 : index
    %c0_62 = arith.constant 0 : index
    %220 = vector.load %arg0[%c7, %c0_61, %c0_62] : memref<8x8x96xf32, #tpu.memory_space<vmem>>, vector<1x8x96xf32>
    %221 = vector.shape_cast %220 : vector<1x8x96xf32> to vector<8x96xf32>
    %cst_63 = arith.constant dense<0.000000e+00> : vector<8x96xf32>
    %222 = tpu.matmul %217, %0, %cst_63 {dimension_numbers = #tpu.dot_dimension_numbers<[1], [0], [0], [1], [0, 0, 1, 1], [], []>} : vector<8x32xf32>, vector<32x96xf32>, vector<8x96xf32> -> vector<8x96xf32>
    %223 = vector.broadcast %1 : vector<1x96xf32> to vector<8x96xf32>
    %224 = arith.addf %222, %223 : vector<8x96xf32>
    %225 = vector.extract_strided_slice %221 {offsets = [0, 0], sizes = [8, 32], strides = [1, 1]} : vector<8x96xf32> to vector<8x32xf32>
    %226 = vector.extract_strided_slice %224 {offsets = [0, 0], sizes = [8, 32], strides = [1, 1]} : vector<8x96xf32> to vector<8x32xf32>
    %227 = arith.addf %225, %226 : vector<8x32xf32>
    %228 = arith.negf %227 : vector<8x32xf32>
    %229 = math.exp %228 : vector<8x32xf32>
    %cst_64 = arith.constant 1.000000e+00 : f32
    %230 = vector.broadcast %cst_64 : f32 to vector<8x32xf32>
    %231 = arith.addf %230, %229 : vector<8x32xf32>
    %232 = arith.divf %230, %231 : vector<8x32xf32>
    %233 = vector.extract_strided_slice %221 {offsets = [0, 32], sizes = [8, 32], strides = [1, 1]} : vector<8x96xf32> to vector<8x32xf32>
    %234 = vector.extract_strided_slice %224 {offsets = [0, 32], sizes = [8, 32], strides = [1, 1]} : vector<8x96xf32> to vector<8x32xf32>
    %235 = arith.addf %233, %234 : vector<8x32xf32>
    %236 = arith.negf %235 : vector<8x32xf32>
    %237 = math.exp %236 : vector<8x32xf32>
    %cst_65 = arith.constant 1.000000e+00 : f32
    %238 = vector.broadcast %cst_65 : f32 to vector<8x32xf32>
    %239 = arith.addf %238, %237 : vector<8x32xf32>
    %240 = arith.divf %238, %239 : vector<8x32xf32>
    %241 = vector.extract_strided_slice %221 {offsets = [0, 64], sizes = [8, 32], strides = [1, 1]} : vector<8x96xf32> to vector<8x32xf32>
    %242 = vector.extract_strided_slice %224 {offsets = [0, 64], sizes = [8, 32], strides = [1, 1]} : vector<8x96xf32> to vector<8x32xf32>
    %243 = arith.mulf %232, %242 : vector<8x32xf32>
    %244 = arith.addf %241, %243 : vector<8x32xf32>
    %245 = math.tanh %244 : vector<8x32xf32>
    %246 = arith.subf %217, %245 : vector<8x32xf32>
    %247 = arith.mulf %240, %246 : vector<8x32xf32>
    %248 = arith.addf %245, %247 : vector<8x32xf32>
    %249 = vector.shape_cast %248 : vector<8x32xf32> to vector<8x1x32xf32>
    %c0_66 = arith.constant 0 : index
    %c7_67 = arith.constant 7 : index
    %c0_68 = arith.constant 0 : index
    %250 = vector.load %arg4[%c0_66, %c7_67, %c0_68] : memref<8x8x32xf32, #tpu.memory_space<vmem>>, vector<8x1x32xf32>
    tpu.vector_store %arg4[%c0_66, %c7_67, %c0_68], %249 {strides = array<i32>} : memref<8x8x32xf32, #tpu.memory_space<vmem>>, vector<8x1x32xf32>,
    %c0_69 = arith.constant 0 : index
    %c0_70 = arith.constant 0 : index
    %251 = vector.load %arg5[%c0_69, %c0_70] : memref<8x32xf32, #tpu.memory_space<vmem>>, vector<8x32xf32>
    tpu.vector_store %arg5[%c0_69, %c0_70], %248 {strides = array<i32>} : memref<8x32xf32, #tpu.memory_space<vmem>>, vector<8x32xf32>,
    return
  }
}

</mosaic_0001>

<llo_original>
// kernel: tpu_custom_call.1
$region0: #{tpu_custom_call.1}
  #allocation0 [shape = 'u32[]', space=smem, size = 0x4, offset = 0x4, fixed_abs, tag = 'smem constant byte address 0x4 - core index']
  #allocation1 [shape = 'u32[144,128]{1,0:T(1,128)}', space=vmem, size = 0x12000, scoped, tag = 'internal scratch']
  %s0 = inlined_call_operand.hbm [shape: f32[8,8,96], index: 0, kind: input, shape index: {}]
  %s1 = inlined_call_operand.hbm [shape: f32[8,32], index: 1, kind: input, shape index: {}]
  %s2 = inlined_call_operand.hbm [shape: f32[32,96], index: 2, kind: input, shape index: {}]
  %s3 = inlined_call_operand.vmem [shape: f32[1,96], index: 3, kind: input, shape index: {}]
  %s4 = inlined_call_operand.hbm [shape: f32[8,8,32], index: 4, kind: output, shape index: {0}]
  %s5 = inlined_call_operand.hbm [shape: f32[8,32], index: 5, kind: output, shape index: {1}]
  %6 = xla_tuple %s4, %s5
  %s7 = sld [smem:[#allocation0]]
  $region46: #{tpu_custom_call.1} parent=0
    _
  %s9 = ssub.s32 1, %s7
  %s10 = scalar_select 0, %s9, %s7
  $region1: #{tpu_custom_call.1} parent=0
    #allocation2 [shape = 'u8[32768]{0}', space=vmem, size = 0x8000, scoped, tag = 'input window, operand 0, single buffered']
    #allocation3 [shape = 's32[1]{0}', space=sflag, size = 0x4, scoped, tag = 'scoped memory for tpu_custom_call.1']
    #allocation4 [shape = 's32[1]{0}', space=sflag, size = 0x4, scoped, tag = 'scoped memory for tpu_custom_call.1']
    #allocation5 [shape = 'u8[4096]{0}', space=vmem, size = 0x1000, scoped, tag = 'input window, operand 1, single buffered']
    #allocation6 [shape = 's32[1]{0}', space=sflag, size = 0x4, scoped, tag = 'scoped memory for tpu_custom_call.1']
    #allocation7 [shape = 'u8[16384]{0}', space=vmem, size = 0x4000, scoped, tag = 'input window, operand 2, single buffered']
    #allocation8 [shape = 'u8[32768]{0}', space=vmem, size = 0x8000, scoped, tag = 'output window, operand 0, single buffered']
    #allocation9 [shape = 'u8[4096]{0}', space=vmem, size = 0x1000, scoped, tag = 'output window, operand 1, single buffered']
    #allocation10 [shape = 's32[1]{0}', space=sflag, size = 0x4, scoped, tag = 'scoped memory for tpu_custom_call.1']
    %11 = vsyncpa [#allocation3], 0
    %12 = vsyncpa [#allocation6], 0
    %13 = vsyncpa [#allocation4], 0
    %14 = vsyncpa [#allocation10], 0
    // Predicated region
    $region2: #{tpu_custom_call.1} parent=1 // pred_check
      _
    $region3: #{tpu_custom_call.1} parent=1 // pred_check_branch
      %16 = sbr.rel (0) target = $region5
    $region4: #{tpu_custom_call.1} parent=1 // pred_region
      %s18 = ssub.s32 1024, 1024
      %19 = vsyncadd [#allocation3], %s18
      %s20 = sshll.u32 [#allocation2], 4
      %s21 = int_to_ptr.vmem [resolvable:$true] %s20
      %26 = dma.hbm_to_vmem [thread:$0]  %s0, 1024, %s21, [#allocation3], 128, 128, 8
    $region5: #{tpu_custom_call.1} parent=1 // pred_fallthru
      _
    // Predicated region
    $region6: #{tpu_custom_call.1} parent=1 // pred_check
      _
    $region7: #{tpu_custom_call.1} parent=1 // pred_check_branch
      %28 = sbr.rel (0) target = $region9
    $region8: #{tpu_custom_call.1} parent=1 // pred_region
      %s30 = ssub.s32 128, 128
      %31 = vsyncadd [#allocation6], %s30
      %s33 = sshll.u32 [#allocation5], 4
      %s34 = int_to_ptr.vmem [resolvable:$true] %s33
      %36 = dma.hbm_to_vmem [thread:$0]  %s1, 128, %s34, [#allocation6]
    $region9: #{tpu_custom_call.1} parent=1 // pred_fallthru
      _
    // Predicated region
    $region10: #{tpu_custom_call.1} parent=1 // pred_check
      _
    $region11: #{tpu_custom_call.1} parent=1 // pred_check_branch
      %38 = sbr.rel (0) target = $region13
    $region12: #{tpu_custom_call.1} parent=1 // pred_region
      %s40 = ssub.s32 512, 512
      %41 = vsyncadd [#allocation6], %s40
      %s42 = sshll.u32 [#allocation7], 4
      %s43 = int_to_ptr.vmem [resolvable:$true] %s42
      %48 = dma.hbm_to_vmem [thread:$0]  %s2, 512, %s43, [#allocation6], 128, 128, 8
    $region13: #{tpu_custom_call.1} parent=1 // pred_fallthru
      _
    // Predicated region
    $region14: #{tpu_custom_call.1} parent=1 // pred_check
      _
    $region15: #{tpu_custom_call.1} parent=1 // pred_check_branch
      %50 = sbr.rel (0) target = $region17
    $region16: #{tpu_custom_call.1} parent=1 // pred_region
      _
    $region17: #{tpu_custom_call.1} parent=1 // pred_fallthru
      _
    // Predicated region
    $region18: #{tpu_custom_call.1} parent=1 // pred_check
      _
    $region19: #{tpu_custom_call.1} parent=1 // pred_check_branch
      %52 = sbr.rel (0) target = $region21
    $region20: #{tpu_custom_call.1} parent=1 // pred_region
      %53 = dma.done [#allocation3], 1024
    $region21: #{tpu_custom_call.1} parent=1 // pred_fallthru
      _
    // Predicated region
    $region22: #{tpu_custom_call.1} parent=1 // pred_check
      _
    $region23: #{tpu_custom_call.1} parent=1 // pred_check_branch
      %55 = sbr.rel (0) target = $region25
    $region24: #{tpu_custom_call.1} parent=1 // pred_region
      %56 = dma.done [#allocation6], 128
    $region25: #{tpu_custom_call.1} parent=1 // pred_fallthru
      _
    // Predicated region
    $region26: #{tpu_custom_call.1} parent=1 // pred_check
      _
    $region27: #{tpu_custom_call.1} parent=1 // pred_check_branch
      %58 = sbr.rel (0) target = $region29
    $region28: #{tpu_custom_call.1} parent=1 // pred_region
      %59 = dma.done [#allocation6], 512
    $region29: #{tpu_custom_call.1} parent=1 // pred_fallthru
      _
    %v60 = vld [vmem:[#allocation7] sm:$0xff]
    %v61 = vld [vmem:[#allocation7 + $0x8] sm:$0xff]
    %v62 = vld [vmem:[#allocation7 + $0x10] sm:$0xff]
    %v63 = vld [vmem:[#allocation7 + $0x18] sm:$0xff]
    %v64 = vld [vmem:[%s3] sm:$0x1]
    %v65 = vld [vmem:[#allocation5] sm:$0xff]
    %v66 = vld [vmem:[#allocation2] sm:$0xff]
    %v68 = vlaneseq
    %v69 = vshrl.u32 %v68, 7
    %v70 = vsub.s32 0, %v69
    %v71 = vrot.slane %v64, %v70
    %vm73 = vcmask 261120
    %v75 = vsel %vm73, %v65, 0
    %77 = vmatprep.subr.mxu0 0.0
    %78 = vmatpush1.msra.mxu0 %v60
    %79 = vmatprep.subr.mxu0 0.0
    %80 = vmatpush1.msra.mxu0 %v61
    %81 = vmatprep.subr.mxu0 0.0
    %82 = vmatpush1.msra.mxu0 %v62
    %83 = vmatprep.subr.mxu0 0.0
    %84 = vmatpush1.msra.mxu0 %v63
    %85 = vmatprep.subr.mxu0 0.0
    %86 = vmatpush1.msra.mxu0 0.0
    %87 = vmatprep.subr.mxu0 0.0
    %88 = vmatpush1.msra.mxu0 0.0
    %89 = vmatprep.subr.mxu0 0.0
    %90 = vmatpush1.msra.mxu0 0.0
    %91 = vmatprep.subr.mxu0 0.0
    %92 = vmatpush1.msra.mxu0 0.0
    %93 = vmatprep.subr.mxu0 0.0
    %94 = vmatpush1.msra.mxu0 0.0
    %95 = vmatprep.subr.mxu0 0.0
    %96 = vmatpush1.msra.mxu0 0.0
    %97 = vmatprep.subr.mxu0 0.0
    %98 = vmatpush1.msra.mxu0 0.0
    %99 = vmatprep.subr.mxu0 0.0
    %100 = vmatpush1.msra.mxu0 0.0
    %101 = vmatprep.subr.mxu0 0.0
    %102 = vmatpush1.msra.mxu0 0.0
    %103 = vmatprep.subr.mxu0 0.0
    %104 = vmatpush1.msra.mxu0 0.0
    %105 = vmatprep.subr.mxu0 0.0
    %106 = vmatpush1.msra.mxu0 0.0
    %107 = vmatprep.subr.mxu0 0.0
    %108 = vmatpush1.msra.mxu0 0.0
    %109 = vmatprep.subr.mxu0 0.0
    %110 = vmatpush1.msra.mxu0 0.0
    %111 = vmatprep.subr.mxu0 0.0
    %112 = vmatpush1.msra.mxu0 0.0
    %113 = vmatprep.subr.mxu0 0.0
    %114 = vmatpush1.msra.mxu0 0.0
    %115 = vmatprep.subr.mxu0 0.0
    %116 = vmatpush1.msra.mxu0 0.0
    %117 = vmatprep.subr.mxu0 0.0
    %118 = vmatpush1.msra.mxu0 0.0
    %119 = vmatprep.subr.mxu0 0.0
    %120 = vmatpush1.msra.mxu0 0.0
    %121 = vmatprep.subr.mxu0 0.0
    %122 = vmatpush1.msra.mxu0 0.0
    %123 = vmatprep.subr.mxu0 0.0
    %124 = vmatpush1.msra.mxu0 0.0
    %125 = vmatprep.subr.mxu0 0.0
    %126 = vmatpush1.msra.mxu0 0.0
    %127 = vmatprep.subr.mxu0 0.0
    %128 = vmatpush1.msra.mxu0 0.0
    %129 = vmatprep.subr.mxu0 0.0
    %130 = vmatpush1.msra.mxu0 0.0
    %131 = vmatprep.subr.mxu0 0.0
    %132 = vmatpush1.msra.mxu0 0.0
    %133 = vmatprep.subr.mxu0 0.0
    %134 = vmatpush1.msra.mxu0 0.0
    %135 = vmatprep.subr.mxu0 0.0
    %136 = vmatpush1.msra.mxu0 0.0
    %137 = vmatprep.subr.mxu0 0.0
    %138 = vmatpush1.msra.mxu0 0.0
    %139 = vmatprep.subr.mxu0 0.0
    %140 = vmatpush1.msra.mxu0 0.0
    %141 = vmatprep.mubr.f32.mxu0 0.0
    %142 = vmatmul.mubr.f32.gmra.mrb[0].mxu0 %v75
    %v143 = vpop.f32.mrb[0].mxu0
    %v144 = vadd.f32 %v71, %v143
    %v145 = vpop.f32.mrb[0].mxu0
    %146 = vdwg.mxu0
    %v147 = vadd.f32 %v66, %v144
    %v148 = vxor.u32 %v147, 2147483648
    %v149 = vmul.f32 %v148, 1.442695
    %v150 = vpow.pop %v149
    %v151 = vadd.f32 %v150, 1.0
    %v152 = vrcp.pop %v151
    %v153 = vmul.f32 1.0, %v152
    %155 = vrot.lane.b32.xlu0 %v144, 64
    %v156 = vpop.permute.xlu0 %155
    %v158 = vmul.f32 %v153, %v156
    %160 = vrot.lane.b32.xlu0 %v158, 64
    %v161 = vpop.permute.xlu0 %160
    %v163 = vadd.f32 %v66, %v161
    %v164 = vtanh.pop %v163
    %166 = vrot.lane.b32.xlu0 %v164, 64
    %v167 = vpop.permute.xlu0 %166
    %v169 = vsub.f32 %v65, %v167
    %171 = vrot.lane.b32.xlu0 %v169, 32
    %v172 = vpop.permute.xlu0 %171
    %v174 = vmul.f32 %v153, %v172
    %176 = vrot.lane.b32.xlu0 %v174, 32
    %v177 = vpop.permute.xlu0 %176
    %v179 = vadd.f32 %v164, %v177
    %v181 = vcombine.high %v179, %v179
    %v183 = vunpack.c.l.s4 1966171168
    %v184 = vunpack.c.0.s8 %v183
    %v185 = vlaneseq
    %v186 = vshrl.u32 %v185, 7
    %v187 = vsub.s32 %v184, %v186
    %v188 = vrot.slane %v179, %v187
    %v190 = vunpack.c.l.s4 1966171168
    %v191 = vunpack.c.0.s8 %v190
    %v192 = vlaneseq
    %v193 = vshrl.u32 %v192, 7
    %v194 = vsub.s32 %v191, %v193
    %v195 = vrot.slane %v181, %v194
    %v196 = vcombine.high %v188, %v188
    %v197 = vcombine.high %v195, %v195
    %v199 = vunpack.c.l.s4 1966171168
    %v200 = vunpack.c.0.s8 %v199
    %v201 = vlaneseq
    %v202 = vshrl.u32 %v201, 7
    %v203 = vsub.s32 %v200, %v202
    %v204 = vrot.slane %v188, %v203
    %v206 = vunpack.c.l.s4 1966171168
    %v207 = vunpack.c.0.s8 %v206
    %v208 = vlaneseq
    %v209 = vshrl.u32 %v208, 7
    %v210 = vsub.s32 %v207, %v209
    %v211 = vrot.slane %v195, %v210
    %v213 = vunpack.c.l.s4 1966171168
    %v214 = vunpack.c.0.s8 %v213
    %v215 = vlaneseq
    %v216 = vshrl.u32 %v215, 7
    %v217 = vsub.s32 %v214, %v216
    %v218 = vrot.slane %v196, %v217
    %v220 = vunpack.c.l.s4 1966171168
    %v221 = vunpack.c.0.s8 %v220
    %v222 = vlaneseq
    %v223 = vshrl.u32 %v222, 7
    %v224 = vsub.s32 %v221, %v223
    %v225 = vrot.slane %v197, %v224
    %v226 = vcombine.high %v204, %v204
    %v227 = vcombine.high %v211, %v211
    %v228 = vcombine.high %v218, %v218
    %v229 = vcombine.high %v225, %v225
    %v230 = vlaneseq
    %v231 = vshrl.u32 %v230, 7
    %v232 = vsub.s32 0, %v231
    %v233 = vrot.slane %v204, %v232
    %v234 = vlaneseq
    %v235 = vshrl.u32 %v234, 7
    %v236 = vsub.s32 0, %v235
    %v237 = vrot.slane %v218, %v236
    %v238 = vlaneseq
    %v239 = vshrl.u32 %v238, 7
    %v240 = vsub.s32 0, %v239
    %v241 = vrot.slane %v226, %v240
    %v242 = vlaneseq
    %v243 = vshrl.u32 %v242, 7
    %v244 = vsub.s32 0, %v243
    %v245 = vrot.slane %v228, %v244
    %v246 = vlaneseq
    %v247 = vshrl.u32 %v246, 7
    %v248 = vsub.s32 0, %v247
    %v249 = vrot.slane %v211, %v248
    %v250 = vlaneseq
    %v251 = vshrl.u32 %v250, 7
    %v252 = vsub.s32 0, %v251
    %v253 = vrot.slane %v225, %v252
    %v254 = vlaneseq
    %v255 = vshrl.u32 %v254, 7
    %v256 = vsub.s32 0, %v255
    %v257 = vrot.slane %v227, %v256
    %v258 = vlaneseq
    %v259 = vshrl.u32 %v258, 7
    %v260 = vsub.s32 0, %v259
    %v261 = vrot.slane %v229, %v260
    %262 = vrot.lane.b32.xlu0 %v233, 64
    %v263 = vpop.permute.xlu0 %262
    %264 = vrot.lane.b32.xlu0 %v237, 64
    %v265 = vpop.permute.xlu0 %264
    %266 = vrot.lane.b32.xlu0 %v241, 64
    %v267 = vpop.permute.xlu0 %266
    %268 = vrot.lane.b32.xlu0 %v245, 64
    %v269 = vpop.permute.xlu0 %268
    %270 = vrot.lane.b32.xlu0 %v249, 64
    %v271 = vpop.permute.xlu0 %270
    %272 = vrot.lane.b32.xlu0 %v253, 64
    %v273 = vpop.permute.xlu0 %272
    %274 = vrot.lane.b32.xlu0 %v257, 64
    %v275 = vpop.permute.xlu0 %274
    %276 = vrot.lane.b32.xlu0 %v261, 64
    %v277 = vpop.permute.xlu0 %276
    %vm286 = vcmask 253952
    %287 = vst.msk [vmem:[#allocation8] sm:$0x1] %vm286, %v263
    %288 = vst.msk [vmem:[#allocation8 + $0x8] sm:$0x1] %vm286, %v265
    %289 = vst.msk [vmem:[#allocation8 + $0x10] sm:$0x1] %vm286, %v267
    %290 = vst.msk [vmem:[#allocation8 + $0x18] sm:$0x1] %vm286, %v269
    %291 = vst.msk [vmem:[#allocation8 + $0x20] sm:$0x1] %vm286, %v271
    %292 = vst.msk [vmem:[#allocation8 + $0x28] sm:$0x1] %vm286, %v273
    %293 = vst.msk [vmem:[#allocation8 + $0x30] sm:$0x1] %vm286, %v275
    %294 = vst.msk [vmem:[#allocation8 + $0x38] sm:$0x1] %vm286, %v277
    %s295 = scalar_lea.vmem [#allocation2], 8
    %v296 = vld [vmem:[%s295] sm:$0xff]
    %297 = vrot.lane.b32.xlu0 %v179, 64
    %v298 = vpop.permute.xlu0 %297
    %v299 = vsel %vm73, %v298, 0
    %301 = vmatprep.subr.mxu0 0.0
    %302 = vmatpush1.msra.mxu0 %v60
    %303 = vmatprep.subr.mxu0 0.0
    %304 = vmatpush1.msra.mxu0 %v61
    %305 = vmatprep.subr.mxu0 0.0
    %306 = vmatpush1.msra.mxu0 %v62
    %307 = vmatprep.subr.mxu0 0.0
    %308 = vmatpush1.msra.mxu0 %v63
    %309 = vmatprep.subr.mxu0 0.0
    %310 = vmatpush1.msra.mxu0 0.0
    %311 = vmatprep.subr.mxu0 0.0
    %312 = vmatpush1.msra.mxu0 0.0
    %313 = vmatprep.subr.mxu0 0.0
    %314 = vmatpush1.msra.mxu0 0.0
    %315 = vmatprep.subr.mxu0 0.0
    %316 = vmatpush1.msra.mxu0 0.0
    %317 = vmatprep.subr.mxu0 0.0
    %318 = vmatpush1.msra.mxu0 0.0
    %319 = vmatprep.subr.mxu0 0.0
    %320 = vmatpush1.msra.mxu0 0.0
    %321 = vmatprep.subr.mxu0 0.0
    %322 = vmatpush1.msra.mxu0 0.0
    %323 = vmatprep.subr.mxu0 0.0
    %324 = vmatpush1.msra.mxu0 0.0
    %325 = vmatprep.subr.mxu0 0.0
    %326 = vmatpush1.msra.mxu0 0.0
    %327 = vmatprep.subr.mxu0 0.0
    %328 = vmatpush1.msra.mxu0 0.0
    %329 = vmatprep.subr.mxu0 0.0
    %330 = vmatpush1.msra.mxu0 0.0
    %331 = vmatprep.subr.mxu0 0.0
    %332 = vmatpush1.msra.mxu0 0.0
    %333 = vmatprep.subr.mxu0 0.0
    %334 = vmatpush1.msra.mxu0 0.0
    %335 = vmatprep.subr.mxu0 0.0
    %336 = vmatpush1.msra.mxu0 0.0
    %337 = vmatprep.subr.mxu0 0.0
    %338 = vmatpush1.msra.mxu0 0.0
    %339 = vmatprep.subr.mxu0 0.0
    %340 = vmatpush1.msra.mxu0 0.0
    %341 = vmatprep.subr.mxu0 0.0
    %342 = vmatpush1.msra.mxu0 0.0
    %343 = vmatprep.subr.mxu0 0.0
    %344 = vmatpush1.msra.mxu0 0.0
    %345 = vmatprep.subr.mxu0 0.0
    %346 = vmatpush1.msra.mxu0 0.0
    %347 = vmatprep.subr.mxu0 0.0
    %348 = vmatpush1.msra.mxu0 0.0
    %349 = vmatprep.subr.mxu0 0.0
    %350 = vmatpush1.msra.mxu0 0.0
    %351 = vmatprep.subr.mxu0 0.0
    %352 = vmatpush1.msra.mxu0 0.0
    %353 = vmatprep.subr.mxu0 0.0
    %354 = vmatpush1.msra.mxu0 0.0
    %355 = vmatprep.subr.mxu0 0.0
    %356 = vmatpush1.msra.mxu0 0.0
    %357 = vmatprep.subr.mxu0 0.0
    %358 = vmatpush1.msra.mxu0 0.0
    %359 = vmatprep.subr.mxu0 0.0
    %360 = vmatpush1.msra.mxu0 0.0
    %361 = vmatprep.subr.mxu0 0.0
    %362 = vmatpush1.msra.mxu0 0.0
    %363 = vmatprep.subr.mxu0 0.0
    %364 = vmatpush1.msra.mxu0 0.0
    %365 = vmatprep.mubr.f32.mxu0 0.0
    %366 = vmatmul.mubr.f32.gmra.mrb[0].mxu0 %v299
    %v367 = vpop.f32.mrb[0].mxu0
    %v368 = vadd.f32 %v71, %v367
    %v369 = vpop.f32.mrb[0].mxu0
    %370 = vdwg.mxu0
    %v371 = vadd.f32 %v296, %v368
    %v372 = vxor.u32 %v371, 2147483648
    %v373 = vmul.f32 %v372, 1.442695
    %v374 = vpow.pop %v373
    %v375 = vadd.f32 %v374, 1.0
    %v376 = vrcp.pop %v375
    %v377 = vmul.f32 1.0, %v376
    %379 = vrot.lane.b32.xlu0 %v368, 64
    %v380 = vpop.permute.xlu0 %379
    %v382 = vmul.f32 %v377, %v380
    %384 = vrot.lane.b32.xlu0 %v382, 64
    %v385 = vpop.permute.xlu0 %384
    %v387 = vadd.f32 %v296, %v385
    %v388 = vtanh.pop %v387
    %v389 = vsub.f32 %v179, %v388
    %391 = vrot.lane.b32.xlu0 %v389, 96
    %v392 = vpop.permute.xlu0 %391
    %v394 = vmul.f32 %v377, %v392
    %396 = vrot.lane.b32.xlu0 %v394, 32
    %v397 = vpop.permute.xlu0 %396
    %v399 = vadd.f32 %v388, %v397
    %v401 = vcombine.high %v399, %v399
    %v403 = vunpack.c.l.s4 1966171168
    %v404 = vunpack.c.0.s8 %v403
    %v405 = vlaneseq
    %v406 = vshrl.u32 %v405, 7
    %v407 = vsub.s32 %v404, %v406
    %v408 = vrot.slane %v399, %v407
    %v410 = vunpack.c.l.s4 1966171168
    %v411 = vunpack.c.0.s8 %v410
    %v412 = vlaneseq
    %v413 = vshrl.u32 %v412, 7
    %v414 = vsub.s32 %v411, %v413
    %v415 = vrot.slane %v401, %v414
    %v416 = vcombine.high %v408, %v408
    %v417 = vcombine.high %v415, %v415
    %v419 = vunpack.c.l.s4 1966171168
    %v420 = vunpack.c.0.s8 %v419
    %v421 = vlaneseq
    %v422 = vshrl.u32 %v421, 7
    %v423 = vsub.s32 %v420, %v422
    %v424 = vrot.slane %v408, %v423
    %v426 = vunpack.c.l.s4 1966171168
    %v427 = vunpack.c.0.s8 %v426
    %v428 = vlaneseq
    %v429 = vshrl.u32 %v428, 7
    %v430 = vsub.s32 %v427, %v429
    %v431 = vrot.slane %v415, %v430
    %v433 = vunpack.c.l.s4 1966171168
    %v434 = vunpack.c.0.s8 %v433
    %v435 = vlaneseq
    %v436 = vshrl.u32 %v435, 7
    %v437 = vsub.s32 %v434, %v436
    %v438 = vrot.slane %v416, %v437
    %v440 = vunpack.c.l.s4 1966171168
    %v441 = vunpack.c.0.s8 %v440
    %v442 = vlaneseq
    %v443 = vshrl.u32 %v442, 7
    %v444 = vsub.s32 %v441, %v443
    %v445 = vrot.slane %v417, %v444
    %v446 = vcombine.high %v424, %v424
    %v447 = vcombine.high %v431, %v431
    %v448 = vcombine.high %v438, %v438
    %v449 = vcombine.high %v445, %v445
    %v450 = vlaneseq
    %v451 = vshrl.u32 %v450, 7
    %v452 = vsub.s32 0, %v451
    %v453 = vrot.slane %v424, %v452
    %v454 = vlaneseq
    %v455 = vshrl.u32 %v454, 7
    %v456 = vsub.s32 0, %v455
    %v457 = vrot.slane %v438, %v456
    %v458 = vlaneseq
    %v459 = vshrl.u32 %v458, 7
    %v460 = vsub.s32 0, %v459
    %v461 = vrot.slane %v446, %v460
    %v462 = vlaneseq
    %v463 = vshrl.u32 %v462, 7
    %v464 = vsub.s32 0, %v463
    %v465 = vrot.slane %v448, %v464
    %v466 = vlaneseq
    %v467 = vshrl.u32 %v466, 7
    %v468 = vsub.s32 0, %v467
    %v469 = vrot.slane %v431, %v468
    %v470 = vlaneseq
    %v471 = vshrl.u32 %v470, 7
    %v472 = vsub.s32 0, %v471
    %v473 = vrot.slane %v445, %v472
    %v474 = vlaneseq
    %v475 = vshrl.u32 %v474, 7
    %v476 = vsub.s32 0, %v475
    %v477 = vrot.slane %v447, %v476
    %v478 = vlaneseq
    %v479 = vshrl.u32 %v478, 7
    %v480 = vsub.s32 0, %v479
    %v481 = vrot.slane %v449, %v480
    %482 = vrot.lane.b32.xlu0 %v453, 64
    %v483 = vpop.permute.xlu0 %482
    %484 = vrot.lane.b32.xlu0 %v457, 64
    %v485 = vpop.permute.xlu0 %484
    %486 = vrot.lane.b32.xlu0 %v461, 64
    %v487 = vpop.permute.xlu0 %486
    %488 = vrot.lane.b32.xlu0 %v465, 64
    %v489 = vpop.permute.xlu0 %488
    %490 = vrot.lane.b32.xlu0 %v469, 64
    %v491 = vpop.permute.xlu0 %490
    %492 = vrot.lane.b32.xlu0 %v473, 64
    %v493 = vpop.permute.xlu0 %492
    %494 = vrot.lane.b32.xlu0 %v477, 64
    %v495 = vpop.permute.xlu0 %494
    %496 = vrot.lane.b32.xlu0 %v481, 64
    %v497 = vpop.permute.xlu0 %496
    %506 = vst.msk [vmem:[#allocation8 + $0x1] sm:$0x1] %vm286, %v483
    %507 = vst.msk [vmem:[#allocation8 + $0x9] sm:$0x1] %vm286, %v485
    %508 = vst.msk [vmem:[#allocation8 + $0x11] sm:$0x1] %vm286, %v487
    %509 = vst.msk [vmem:[#allocation8 + $0x19] sm:$0x1] %vm286, %v489
    %510 = vst.msk [vmem:[#allocation8 + $0x21] sm:$0x1] %vm286, %v491
    %511 = vst.msk [vmem:[#allocation8 + $0x29] sm:$0x1] %vm286, %v493
    %512 = vst.msk [vmem:[#allocation8 + $0x31] sm:$0x1] %vm286, %v495
    %513 = vst.msk [vmem:[#allocation8 + $0x39] sm:$0x1] %vm286, %v497
    %s514 = scalar_lea.vmem [#allocation2], 16
    %v515 = vld [vmem:[%s514] sm:$0xff]
    %516 = vrot.lane.b32.xlu0 %v399, 64
    %v517 = vpop.permute.xlu0 %516
    %v518 = vsel %vm73, %v517, 0
    %520 = vmatprep.subr.mxu0 0.0
    %521 = vmatpush1.msra.mxu0 %v60
    %522 = vmatprep.subr.mxu0 0.0
    %523 = vmatpush1.msra.mxu0 %v61
    %524 = vmatprep.subr.mxu0 0.0
    %525 = vmatpush1.msra.mxu0 %v62
    %526 = vmatprep.subr.mxu0 0.0
    %527 = vmatpush1.msra.mxu0 %v63
    %528 = vmatprep.subr.mxu0 0.0
    %529 = vmatpush1.msra.mxu0 0.0
    %530 = vmatprep.subr.mxu0 0.0
    %531 = vmatpush1.msra.mxu0 0.0
    %532 = vmatprep.subr.mxu0 0.0
    %533 = vmatpush1.msra.mxu0 0.0
    %534 = vmatprep.subr.mxu0 0.0
    %535 = vmatpush1.msra.mxu0 0.0
    %536 = vmatprep.subr.mxu0 0.0
    %537 = vmatpush1.msra.mxu0 0.0
    %538 = vmatprep.subr.mxu0 0.0
    %539 = vmatpush1.msra.mxu0 0.0
    %540 = vmatprep.subr.mxu0 0.0
    %541 = vmatpush1.msra.mxu0 0.0
    %542 = vmatprep.subr.mxu0 0.0
    %543 = vmatpush1.msra.mxu0 0.0
    %544 = vmatprep.subr.mxu0 0.0
    %545 = vmatpush1.msra.mxu0 0.0
    %546 = vmatprep.subr.mxu0 0.0
    %547 = vmatpush1.msra.mxu0 0.0
    %548 = vmatprep.subr.mxu0 0.0
    %549 = vmatpush1.msra.mxu0 0.0
    %550 = vmatprep.subr.mxu0 0.0
    %551 = vmatpush1.msra.mxu0 0.0
    %552 = vmatprep.subr.mxu0 0.0
    %553 = vmatpush1.msra.mxu0 0.0
    %554 = vmatprep.subr.mxu0 0.0
    %555 = vmatpush1.msra.mxu0 0.0
    %556 = vmatprep.subr.mxu0 0.0
    %557 = vmatpush1.msra.mxu0 0.0
    %558 = vmatprep.subr.mxu0 0.0
    %559 = vmatpush1.msra.mxu0 0.0
    %560 = vmatprep.subr.mxu0 0.0
    %561 = vmatpush1.msra.mxu0 0.0
    %562 = vmatprep.subr.mxu0 0.0
    %563 = vmatpush1.msra.mxu0 0.0
    %564 = vmatprep.subr.mxu0 0.0
    %565 = vmatpush1.msra.mxu0 0.0
    %566 = vmatprep.subr.mxu0 0.0
    %567 = vmatpush1.msra.mxu0 0.0
    %568 = vmatprep.subr.mxu0 0.0
    %569 = vmatpush1.msra.mxu0 0.0
    %570 = vmatprep.subr.mxu0 0.0
    %571 = vmatpush1.msra.mxu0 0.0
    %572 = vmatprep.subr.mxu0 0.0
    %573 = vmatpush1.msra.mxu0 0.0
    %574 = vmatprep.subr.mxu0 0.0
    %575 = vmatpush1.msra.mxu0 0.0
    %576 = vmatprep.subr.mxu0 0.0
    %577 = vmatpush1.msra.mxu0 0.0
    %578 = vmatprep.subr.mxu0 0.0
    %579 = vmatpush1.msra.mxu0 0.0
    %580 = vmatprep.subr.mxu0 0.0
    %581 = vmatpush1.msra.mxu0 0.0
    %582 = vmatprep.subr.mxu0 0.0
    %583 = vmatpush1.msra.mxu0 0.0
    %584 = vmatprep.mubr.f32.mxu0 0.0
    %585 = vmatmul.mubr.f32.gmra.mrb[0].mxu0 %v518
    %v586 = vpop.f32.mrb[0].mxu0
    %v587 = vadd.f32 %v71, %v586
    %v588 = vpop.f32.mrb[0].mxu0
    %589 = vdwg.mxu0
    %v590 = vadd.f32 %v515, %v587
    %v591 = vxor.u32 %v590, 2147483648
    %v592 = vmul.f32 %v591, 1.442695
    %v593 = vpow.pop %v592
    %v594 = vadd.f32 %v593, 1.0
    %v595 = vrcp.pop %v594
    %v596 = vmul.f32 1.0, %v595
    %598 = vrot.lane.b32.xlu0 %v587, 64
    %v599 = vpop.permute.xlu0 %598
    %v601 = vmul.f32 %v596, %v599
    %603 = vrot.lane.b32.xlu0 %v601, 64
    %v604 = vpop.permute.xlu0 %603
    %v606 = vadd.f32 %v515, %v604
    %v607 = vtanh.pop %v606
    %v608 = vsub.f32 %v399, %v607
    %610 = vrot.lane.b32.xlu0 %v608, 96
    %v611 = vpop.permute.xlu0 %610
    %v613 = vmul.f32 %v596, %v611
    %615 = vrot.lane.b32.xlu0 %v613, 32
    %v616 = vpop.permute.xlu0 %615
    %v618 = vadd.f32 %v607, %v616
    %v620 = vcombine.high %v618, %v618
    %v622 = vunpack.c.l.s4 1966171168
    %v623 = vunpack.c.0.s8 %v622
    %v624 = vlaneseq
    %v625 = vshrl.u32 %v624, 7
    %v626 = vsub.s32 %v623, %v625
    %v627 = vrot.slane %v618, %v626
    %v629 = vunpack.c.l.s4 1966171168
    %v630 = vunpack.c.0.s8 %v629
    %v631 = vlaneseq
    %v632 = vshrl.u32 %v631, 7
    %v633 = vsub.s32 %v630, %v632
    %v634 = vrot.slane %v620, %v633
    %v635 = vcombine.high %v627, %v627
    %v636 = vcombine.high %v634, %v634
    %v638 = vunpack.c.l.s4 1966171168
    %v639 = vunpack.c.0.s8 %v638
    %v640 = vlaneseq
    %v641 = vshrl.u32 %v640, 7
    %v642 = vsub.s32 %v639, %v641
    %v643 = vrot.slane %v627, %v642
    %v645 = vunpack.c.l.s4 1966171168
    %v646 = vunpack.c.0.s8 %v645
    %v647 = vlaneseq
    %v648 = vshrl.u32 %v647, 7
    %v649 = vsub.s32 %v646, %v648
    %v650 = vrot.slane %v634, %v649
    %v652 = vunpack.c.l.s4 1966171168
    %v653 = vunpack.c.0.s8 %v652
    %v654 = vlaneseq
    %v655 = vshrl.u32 %v654, 7
    %v656 = vsub.s32 %v653, %v655
    %v657 = vrot.slane %v635, %v656
    %v659 = vunpack.c.l.s4 1966171168
    %v660 = vunpack.c.0.s8 %v659
    %v661 = vlaneseq
    %v662 = vshrl.u32 %v661, 7
    %v663 = vsub.s32 %v660, %v662
    %v664 = vrot.slane %v636, %v663
    %v665 = vcombine.high %v643, %v643
    %v666 = vcombine.high %v650, %v650
    %v667 = vcombine.high %v657, %v657
    %v668 = vcombine.high %v664, %v664
    %v669 = vlaneseq
    %v670 = vshrl.u32 %v669, 7
    %v671 = vsub.s32 0, %v670
    %v672 = vrot.slane %v643, %v671
    %v673 = vlaneseq
    %v674 = vshrl.u32 %v673, 7
    %v675 = vsub.s32 0, %v674
    %v676 = vrot.slane %v657, %v675
    %v677 = vlaneseq
    %v678 = vshrl.u32 %v677, 7
    %v679 = vsub.s32 0, %v678
    %v680 = vrot.slane %v665, %v679
    %v681 = vlaneseq
    %v682 = vshrl.u32 %v681, 7
    %v683 = vsub.s32 0, %v682
    %v684 = vrot.slane %v667, %v683
    %v685 = vlaneseq
    %v686 = vshrl.u32 %v685, 7
    %v687 = vsub.s32 0, %v686
    %v688 = vrot.slane %v650, %v687
    %v689 = vlaneseq
    %v690 = vshrl.u32 %v689, 7
    %v691 = vsub.s32 0, %v690
    %v692 = vrot.slane %v664, %v691
    %v693 = vlaneseq
    %v694 = vshrl.u32 %v693, 7
    %v695 = vsub.s32 0, %v694
    %v696 = vrot.slane %v666, %v695
    %v697 = vlaneseq
    %v698 = vshrl.u32 %v697, 7
    %v699 = vsub.s32 0, %v698
    %v700 = vrot.slane %v668, %v699
    %701 = vrot.lane.b32.xlu0 %v672, 64
    %v702 = vpop.permute.xlu0 %701
    %703 = vrot.lane.b32.xlu0 %v676, 64
    %v704 = vpop.permute.xlu0 %703
    %705 = vrot.lane.b32.xlu0 %v680, 64
    %v706 = vpop.permute.xlu0 %705
    %707 = vrot.lane.b32.xlu0 %v684, 64
    %v708 = vpop.permute.xlu0 %707
    %709 = vrot.lane.b32.xlu0 %v688, 64
    %v710 = vpop.permute.xlu0 %709
    %711 = vrot.lane.b32.xlu0 %v692, 64
    %v712 = vpop.permute.xlu0 %711
    %713 = vrot.lane.b32.xlu0 %v696, 64
    %v714 = vpop.permute.xlu0 %713
    %715 = vrot.lane.b32.xlu0 %v700, 64
    %v716 = vpop.permute.xlu0 %715
    %725 = vst.msk [vmem:[#allocation8 + $0x2] sm:$0x1] %vm286, %v702
    %726 = vst.msk [vmem:[#allocation8 + $0xa] sm:$0x1] %vm286, %v704
    %727 = vst.msk [vmem:[#allocation8 + $0x12] sm:$0x1] %vm286, %v706
    %728 = vst.msk [vmem:[#allocation8 + $0x1a] sm:$0x1] %vm286, %v708
    %729 = vst.msk [vmem:[#allocation8 + $0x22] sm:$0x1] %vm286, %v710
    %730 = vst.msk [vmem:[#allocation8 + $0x2a] sm:$0x1] %vm286, %v712
    %731 = vst.msk [vmem:[#allocation8 + $0x32] sm:$0x1] %vm286, %v714
    %732 = vst.msk [vmem:[#allocation8 + $0x3a] sm:$0x1] %vm286, %v716
    %s733 = scalar_lea.vmem [#allocation2], 24
    %v734 = vld [vmem:[%s733] sm:$0xff]
    %735 = vrot.lane.b32.xlu0 %v618, 64
    %v736 = vpop.permute.xlu0 %735
    %v737 = vsel %vm73, %v736, 0
    %739 = vmatprep.subr.mxu0 0.0
    %740 = vmatpush1.msra.mxu0 %v60
    %741 = vmatprep.subr.mxu0 0.0
    %742 = vmatpush1.msra.mxu0 %v61
    %743 = vmatprep.subr.mxu0 0.0
    %744 = vmatpush1.msra.mxu0 %v62
    %745 = vmatprep.subr.mxu0 0.0
    %746 = vmatpush1.msra.mxu0 %v63
    %747 = vmatprep.subr.mxu0 0.0
    %748 = vmatpush1.msra.mxu0 0.0
    %749 = vmatprep.subr.mxu0 0.0
    %750 = vmatpush1.msra.mxu0 0.0
    %751 = vmatprep.subr.mxu0 0.0
    %752 = vmatpush1.msra.mxu0 0.0
    %753 = vmatprep.subr.mxu0 0.0
    %754 = vmatpush1.msra.mxu0 0.0
    %755 = vmatprep.subr.mxu0 0.0
    %756 = vmatpush1.msra.mxu0 0.0
    %757 = vmatprep.subr.mxu0 0.0
    %758 = vmatpush1.msra.mxu0 0.0
    %759 = vmatprep.subr.mxu0 0.0
    %760 = vmatpush1.msra.mxu0 0.0
    %761 = vmatprep.subr.mxu0 0.0
    %762 = vmatpush1.msra.mxu0 0.0
    %763 = vmatprep.subr.mxu0 0.0
    %764 = vmatpush1.msra.mxu0 0.0
    %765 = vmatprep.subr.mxu0 0.0
    %766 = vmatpush1.msra.mxu0 0.0
    %767 = vmatprep.subr.mxu0 0.0
    %768 = vmatpush1.msra.mxu0 0.0
    %769 = vmatprep.subr.mxu0 0.0
    %770 = vmatpush1.msra.mxu0 0.0
    %771 = vmatprep.subr.mxu0 0.0
    %772 = vmatpush1.msra.mxu0 0.0
    %773 = vmatprep.subr.mxu0 0.0
    %774 = vmatpush1.msra.mxu0 0.0
    %775 = vmatprep.subr.mxu0 0.0
    %776 = vmatpush1.msra.mxu0 0.0
    %777 = vmatprep.subr.mxu0 0.0
    %778 = vmatpush1.msra.mxu0 0.0
    %779 = vmatprep.subr.mxu0 0.0
    %780 = vmatpush1.msra.mxu0 0.0
    %781 = vmatprep.subr.mxu0 0.0
    %782 = vmatpush1.msra.mxu0 0.0
    %783 = vmatprep.subr.mxu0 0.0
    %784 = vmatpush1.msra.mxu0 0.0
    %785 = vmatprep.subr.mxu0 0.0
    %786 = vmatpush1.msra.mxu0 0.0
    %787 = vmatprep.subr.mxu0 0.0
    %788 = vmatpush1.msra.mxu0 0.0
    %789 = vmatprep.subr.mxu0 0.0
    %790 = vmatpush1.msra.mxu0 0.0
    %791 = vmatprep.subr.mxu0 0.0
    %792 = vmatpush1.msra.mxu0 0.0
    %793 = vmatprep.subr.mxu0 0.0
    %794 = vmatpush1.msra.mxu0 0.0
    %795 = vmatprep.subr.mxu0 0.0
    %796 = vmatpush1.msra.mxu0 0.0
    %797 = vmatprep.subr.mxu0 0.0
    %798 = vmatpush1.msra.mxu0 0.0
    %799 = vmatprep.subr.mxu0 0.0
    %800 = vmatpush1.msra.mxu0 0.0
    %801 = vmatprep.subr.mxu0 0.0
    %802 = vmatpush1.msra.mxu0 0.0
    %803 = vmatprep.mubr.f32.mxu0 0.0
    %804 = vmatmul.mubr.f32.gmra.mrb[0].mxu0 %v737
    %v805 = vpop.f32.mrb[0].mxu0
    %v806 = vadd.f32 %v71, %v805
    %v807 = vpop.f32.mrb[0].mxu0
    %808 = vdwg.mxu0
    %v809 = vadd.f32 %v734, %v806
    %v810 = vxor.u32 %v809, 2147483648
    %v811 = vmul.f32 %v810, 1.442695
    %v812 = vpow.pop %v811
    %v813 = vadd.f32 %v812, 1.0
    %v814 = vrcp.pop %v813
    %v815 = vmul.f32 1.0, %v814
    %817 = vrot.lane.b32.xlu0 %v806, 64
    %v818 = vpop.permute.xlu0 %817
    %v820 = vmul.f32 %v815, %v818
    %822 = vrot.lane.b32.xlu0 %v820, 64
    %v823 = vpop.permute.xlu0 %822
    %v825 = vadd.f32 %v734, %v823
    %v826 = vtanh.pop %v825
    %v827 = vsub.f32 %v618, %v826
    %829 = vrot.lane.b32.xlu0 %v827, 96
    %v830 = vpop.permute.xlu0 %829
    %v832 = vmul.f32 %v815, %v830
    %834 = vrot.lane.b32.xlu0 %v832, 32
    %v835 = vpop.permute.xlu0 %834
    %v837 = vadd.f32 %v826, %v835
    %v839 = vcombine.high %v837, %v837
    %v841 = vunpack.c.l.s4 1966171168
    %v842 = vunpack.c.0.s8 %v841
    %v843 = vlaneseq
    %v844 = vshrl.u32 %v843, 7
    %v845 = vsub.s32 %v842, %v844
    %v846 = vrot.slane %v837, %v845
    %v848 = vunpack.c.l.s4 1966171168
    %v849 = vunpack.c.0.s8 %v848
    %v850 = vlaneseq
    %v851 = vshrl.u32 %v850, 7
    %v852 = vsub.s32 %v849, %v851
    %v853 = vrot.slane %v839, %v852
    %v854 = vcombine.high %v846, %v846
    %v855 = vcombine.high %v853, %v853
    %v857 = vunpack.c.l.s4 1966171168
    %v858 = vunpack.c.0.s8 %v857
    %v859 = vlaneseq
    %v860 = vshrl.u32 %v859, 7
    %v861 = vsub.s32 %v858, %v860
    %v862 = vrot.slane %v846, %v861
    %v864 = vunpack.c.l.s4 1966171168
    %v865 = vunpack.c.0.s8 %v864
    %v866 = vlaneseq
    %v867 = vshrl.u32 %v866, 7
    %v868 = vsub.s32 %v865, %v867
    %v869 = vrot.slane %v853, %v868
    %v871 = vunpack.c.l.s4 1966171168
    %v872 = vunpack.c.0.s8 %v871
    %v873 = vlaneseq
    %v874 = vshrl.u32 %v873, 7
    %v875 = vsub.s32 %v872, %v874
    %v876 = vrot.slane %v854, %v875
    %v878 = vunpack.c.l.s4 1966171168
    %v879 = vunpack.c.0.s8 %v878
    %v880 = vlaneseq
    %v881 = vshrl.u32 %v880, 7
    %v882 = vsub.s32 %v879, %v881
    %v883 = vrot.slane %v855, %v882
    %v884 = vcombine.high %v862, %v862
    %v885 = vcombine.high %v869, %v869
    %v886 = vcombine.high %v876, %v876
    %v887 = vcombine.high %v883, %v883
    %v888 = vlaneseq
    %v889 = vshrl.u32 %v888, 7
    %v890 = vsub.s32 0, %v889
    %v891 = vrot.slane %v862, %v890
    %v892 = vlaneseq
    %v893 = vshrl.u32 %v892, 7
    %v894 = vsub.s32 0, %v893
    %v895 = vrot.slane %v876, %v894
    %v896 = vlaneseq
    %v897 = vshrl.u32 %v896, 7
    %v898 = vsub.s32 0, %v897
    %v899 = vrot.slane %v884, %v898
    %v900 = vlaneseq
    %v901 = vshrl.u32 %v900, 7
    %v902 = vsub.s32 0, %v901
    %v903 = vrot.slane %v886, %v902
    %v904 = vlaneseq
    %v905 = vshrl.u32 %v904, 7
    %v906 = vsub.s32 0, %v905
    %v907 = vrot.slane %v869, %v906
    %v908 = vlaneseq
    %v909 = vshrl.u32 %v908, 7
    %v910 = vsub.s32 0, %v909
    %v911 = vrot.slane %v883, %v910
    %v912 = vlaneseq
    %v913 = vshrl.u32 %v912, 7
    %v914 = vsub.s32 0, %v913
    %v915 = vrot.slane %v885, %v914
    %v916 = vlaneseq
    %v917 = vshrl.u32 %v916, 7
    %v918 = vsub.s32 0, %v917
    %v919 = vrot.slane %v887, %v918
    %920 = vrot.lane.b32.xlu0 %v891, 64
    %v921 = vpop.permute.xlu0 %920
    %922 = vrot.lane.b32.xlu0 %v895, 64
    %v923 = vpop.permute.xlu0 %922
    %924 = vrot.lane.b32.xlu0 %v899, 64
    %v925 = vpop.permute.xlu0 %924
    %926 = vrot.lane.b32.xlu0 %v903, 64
    %v927 = vpop.permute.xlu0 %926
    %928 = vrot.lane.b32.xlu0 %v907, 64
    %v929 = vpop.permute.xlu0 %928
    %930 = vrot.lane.b32.xlu0 %v911, 64
    %v931 = vpop.permute.xlu0 %930
    %932 = vrot.lane.b32.xlu0 %v915, 64
    %v933 = vpop.permute.xlu0 %932
    %934 = vrot.lane.b32.xlu0 %v919, 64
    %v935 = vpop.permute.xlu0 %934
    %944 = vst.msk [vmem:[#allocation8 + $0x3] sm:$0x1] %vm286, %v921
    %945 = vst.msk [vmem:[#allocation8 + $0xb] sm:$0x1] %vm286, %v923
    %946 = vst.msk [vmem:[#allocation8 + $0x13] sm:$0x1] %vm286, %v925
    %947 = vst.msk [vmem:[#allocation8 + $0x1b] sm:$0x1] %vm286, %v927
    %948 = vst.msk [vmem:[#allocation8 + $0x23] sm:$0x1] %vm286, %v929
    %949 = vst.msk [vmem:[#allocation8 + $0x2b] sm:$0x1] %vm286, %v931
    %950 = vst.msk [vmem:[#allocation8 + $0x33] sm:$0x1] %vm286, %v933
    %951 = vst.msk [vmem:[#allocation8 + $0x3b] sm:$0x1] %vm286, %v935
    %s952 = scalar_lea.vmem [#allocation2], 32
    %v953 = vld [vmem:[%s952] sm:$0xff]
    %954 = vrot.lane.b32.xlu0 %v837, 64
    %v955 = vpop.permute.xlu0 %954
    %v956 = vsel %vm73, %v955, 0
    %958 = vmatprep.subr.mxu0 0.0
    %959 = vmatpush1.msra.mxu0 %v60
    %960 = vmatprep.subr.mxu0 0.0
    %961 = vmatpush1.msra.mxu0 %v61
    %962 = vmatprep.subr.mxu0 0.0
    %963 = vmatpush1.msra.mxu0 %v62
    %964 = vmatprep.subr.mxu0 0.0
    %965 = vmatpush1.msra.mxu0 %v63
    %966 = vmatprep.subr.mxu0 0.0
    %967 = vmatpush1.msra.mxu0 0.0
    %968 = vmatprep.subr.mxu0 0.0
    %969 = vmatpush1.msra.mxu0 0.0
    %970 = vmatprep.subr.mxu0 0.0
    %971 = vmatpush1.msra.mxu0 0.0
    %972 = vmatprep.subr.mxu0 0.0
    %973 = vmatpush1.msra.mxu0 0.0
    %974 = vmatprep.subr.mxu0 0.0
    %975 = vmatpush1.msra.mxu0 0.0
    %976 = vmatprep.subr.mxu0 0.0
    %977 = vmatpush1.msra.mxu0 0.0
    %978 = vmatprep.subr.mxu0 0.0
    %979 = vmatpush1.msra.mxu0 0.0
    %980 = vmatprep.subr.mxu0 0.0
    %981 = vmatpush1.msra.mxu0 0.0
    %982 = vmatprep.subr.mxu0 0.0
    %983 = vmatpush1.msra.mxu0 0.0
    %984 = vmatprep.subr.mxu0 0.0
    %985 = vmatpush1.msra.mxu0 0.0
    %986 = vmatprep.subr.mxu0 0.0
    %987 = vmatpush1.msra.mxu0 0.0
    %988 = vmatprep.subr.mxu0 0.0
    %989 = vmatpush1.msra.mxu0 0.0
    %990 = vmatprep.subr.mxu0 0.0
    %991 = vmatpush1.msra.mxu0 0.0
    %992 = vmatprep.subr.mxu0 0.0
    %993 = vmatpush1.msra.mxu0 0.0
    %994 = vmatprep.subr.mxu0 0.0
    %995 = vmatpush1.msra.mxu0 0.0
    %996 = vmatprep.subr.mxu0 0.0
    %997 = vmatpush1.msra.mxu0 0.0
    %998 = vmatprep.subr.mxu0 0.0
    %999 = vmatpush1.msra.mxu0 0.0
    %1000 = vmatprep.subr.mxu0 0.0
    %1001 = vmatpush1.msra.mxu0 0.0
    %1002 = vmatprep.subr.mxu0 0.0
    %1003 = vmatpush1.msra.mxu0 0.0
    %1004 = vmatprep.subr.mxu0 0.0
    %1005 = vmatpush1.msra.mxu0 0.0
    %1006 = vmatprep.subr.mxu0 0.0
    %1007 = vmatpush1.msra.mxu0 0.0
    %1008 = vmatprep.subr.mxu0 0.0
    %1009 = vmatpush1.msra.mxu0 0.0
    %1010 = vmatprep.subr.mxu0 0.0
    %1011 = vmatpush1.msra.mxu0 0.0
    %1012 = vmatprep.subr.mxu0 0.0
    %1013 = vmatpush1.msra.mxu0 0.0
    %1014 = vmatprep.subr.mxu0 0.0
    %1015 = vmatpush1.msra.mxu0 0.0
    %1016 = vmatprep.subr.mxu0 0.0
    %1017 = vmatpush1.msra.mxu0 0.0
    %1018 = vmatprep.subr.mxu0 0.0
    %1019 = vmatpush1.msra.mxu0 0.0
    %1020 = vmatprep.subr.mxu0 0.0
    %1021 = vmatpush1.msra.mxu0 0.0
    %1022 = vmatprep.mubr.f32.mxu0 0.0
    %1023 = vmatmul.mubr.f32.gmra.mrb[0].mxu0 %v956
    %v1024 = vpop.f32.mrb[0].mxu0
    %v1025 = vadd.f32 %v71, %v1024
    %v1026 = vpop.f32.mrb[0].mxu0
    %1027 = vdwg.mxu0
    %v1028 = vadd.f32 %v953, %v1025
    %v1029 = vxor.u32 %v1028, 2147483648
    %v1030 = vmul.f32 %v1029, 1.442695
    %v1031 = vpow.pop %v1030
    %v1032 = vadd.f32 %v1031, 1.0
    %v1033 = vrcp.pop %v1032
    %v1034 = vmul.f32 1.0, %v1033
    %1036 = vrot.lane.b32.xlu0 %v1025, 64
    %v1037 = vpop.permute.xlu0 %1036
    %v1039 = vmul.f32 %v1034, %v1037
    %1041 = vrot.lane.b32.xlu0 %v1039, 64
    %v1042 = vpop.permute.xlu0 %1041
    %v1044 = vadd.f32 %v953, %v1042
    %v1045 = vtanh.pop %v1044
    %v1046 = vsub.f32 %v837, %v1045
    %1048 = vrot.lane.b32.xlu0 %v1046, 96
    %v1049 = vpop.permute.xlu0 %1048
    %v1051 = vmul.f32 %v1034, %v1049
    %1053 = vrot.lane.b32.xlu0 %v1051, 32
    %v1054 = vpop.permute.xlu0 %1053
    %v1056 = vadd.f32 %v1045, %v1054
    %v1058 = vcombine.high %v1056, %v1056
    %v1060 = vunpack.c.l.s4 1966171168
    %v1061 = vunpack.c.0.s8 %v1060
    %v1062 = vlaneseq
    %v1063 = vshrl.u32 %v1062, 7
    %v1064 = vsub.s32 %v1061, %v1063
    %v1065 = vrot.slane %v1056, %v1064
    %v1067 = vunpack.c.l.s4 1966171168
    %v1068 = vunpack.c.0.s8 %v1067
    %v1069 = vlaneseq
    %v1070 = vshrl.u32 %v1069, 7
    %v1071 = vsub.s32 %v1068, %v1070
    %v1072 = vrot.slane %v1058, %v1071
    %v1073 = vcombine.high %v1065, %v1065
    %v1074 = vcombine.high %v1072, %v1072
    %v1076 = vunpack.c.l.s4 1966171168
    %v1077 = vunpack.c.0.s8 %v1076
    %v1078 = vlaneseq
    %v1079 = vshrl.u32 %v1078, 7
    %v1080 = vsub.s32 %v1077, %v1079
    %v1081 = vrot.slane %v1065, %v1080
    %v1083 = vunpack.c.l.s4 1966171168
    %v1084 = vunpack.c.0.s8 %v1083
    %v1085 = vlaneseq
    %v1086 = vshrl.u32 %v1085, 7
    %v1087 = vsub.s32 %v1084, %v1086
    %v1088 = vrot.slane %v1072, %v1087
    %v1090 = vunpack.c.l.s4 1966171168
    %v1091 = vunpack.c.0.s8 %v1090
    %v1092 = vlaneseq
    %v1093 = vshrl.u32 %v1092, 7
    %v1094 = vsub.s32 %v1091, %v1093
    %v1095 = vrot.slane %v1073, %v1094
    %v1097 = vunpack.c.l.s4 1966171168
    %v1098 = vunpack.c.0.s8 %v1097
    %v1099 = vlaneseq
    %v1100 = vshrl.u32 %v1099, 7
    %v1101 = vsub.s32 %v1098, %v1100
    %v1102 = vrot.slane %v1074, %v1101
    %v1103 = vcombine.high %v1081, %v1081
    %v1104 = vcombine.high %v1088, %v1088
    %v1105 = vcombine.high %v1095, %v1095
    %v1106 = vcombine.high %v1102, %v1102
    %v1107 = vlaneseq
    %v1108 = vshrl.u32 %v1107, 7
    %v1109 = vsub.s32 0, %v1108
    %v1110 = vrot.slane %v1081, %v1109
    %v1111 = vlaneseq
    %v1112 = vshrl.u32 %v1111, 7
    %v1113 = vsub.s32 0, %v1112
    %v1114 = vrot.slane %v1095, %v1113
    %v1115 = vlaneseq
    %v1116 = vshrl.u32 %v1115, 7
    %v1117 = vsub.s32 0, %v1116
    %v1118 = vrot.slane %v1103, %v1117
    %v1119 = vlaneseq
    %v1120 = vshrl.u32 %v1119, 7
    %v1121 = vsub.s32 0, %v1120
    %v1122 = vrot.slane %v1105, %v1121
    %v1123 = vlaneseq
    %v1124 = vshrl.u32 %v1123, 7
    %v1125 = vsub.s32 0, %v1124
    %v1126 = vrot.slane %v1088, %v1125
    %v1127 = vlaneseq
    %v1128 = vshrl.u32 %v1127, 7
    %v1129 = vsub.s32 0, %v1128
    %v1130 = vrot.slane %v1102, %v1129
    %v1131 = vlaneseq
    %v1132 = vshrl.u32 %v1131, 7
    %v1133 = vsub.s32 0, %v1132
    %v1134 = vrot.slane %v1104, %v1133
    %v1135 = vlaneseq
    %v1136 = vshrl.u32 %v1135, 7
    %v1137 = vsub.s32 0, %v1136
    %v1138 = vrot.slane %v1106, %v1137
    %1139 = vrot.lane.b32.xlu0 %v1110, 64
    %v1140 = vpop.permute.xlu0 %1139
    %1141 = vrot.lane.b32.xlu0 %v1114, 64
    %v1142 = vpop.permute.xlu0 %1141
    %1143 = vrot.lane.b32.xlu0 %v1118, 64
    %v1144 = vpop.permute.xlu0 %1143
    %1145 = vrot.lane.b32.xlu0 %v1122, 64
    %v1146 = vpop.permute.xlu0 %1145
    %1147 = vrot.lane.b32.xlu0 %v1126, 64
    %v1148 = vpop.permute.xlu0 %1147
    %1149 = vrot.lane.b32.xlu0 %v1130, 64
    %v1150 = vpop.permute.xlu0 %1149
    %1151 = vrot.lane.b32.xlu0 %v1134, 64
    %v1152 = vpop.permute.xlu0 %1151
    %1153 = vrot.lane.b32.xlu0 %v1138, 64
    %v1154 = vpop.permute.xlu0 %1153
    %1163 = vst.msk [vmem:[#allocation8 + $0x4] sm:$0x1] %vm286, %v1140
    %1164 = vst.msk [vmem:[#allocation8 + $0xc] sm:$0x1] %vm286, %v1142
    %1165 = vst.msk [vmem:[#allocation8 + $0x14] sm:$0x1] %vm286, %v1144
    %1166 = vst.msk [vmem:[#allocation8 + $0x1c] sm:$0x1] %vm286, %v1146
    %1167 = vst.msk [vmem:[#allocation8 + $0x24] sm:$0x1] %vm286, %v1148
    %1168 = vst.msk [vmem:[#allocation8 + $0x2c] sm:$0x1] %vm286, %v1150
    %1169 = vst.msk [vmem:[#allocation8 + $0x34] sm:$0x1] %vm286, %v1152
    %1170 = vst.msk [vmem:[#allocation8 + $0x3c] sm:$0x1] %vm286, %v1154
    %s1171 = scalar_lea.vmem [#allocation2], 40
    %v1172 = vld [vmem:[%s1171] sm:$0xff]
    %1173 = vrot.lane.b32.xlu0 %v1056, 64
    %v1174 = vpop.permute.xlu0 %1173
    %v1175 = vsel %vm73, %v1174, 0
    %1177 = vmatprep.subr.mxu0 0.0
    %1178 = vmatpush1.msra.mxu0 %v60
    %1179 = vmatprep.subr.mxu0 0.0
    %1180 = vmatpush1.msra.mxu0 %v61
    %1181 = vmatprep.subr.mxu0 0.0
    %1182 = vmatpush1.msra.mxu0 %v62
    %1183 = vmatprep.subr.mxu0 0.0
    %1184 = vmatpush1.msra.mxu0 %v63
    %1185 = vmatprep.subr.mxu0 0.0
    %1186 = vmatpush1.msra.mxu0 0.0
    %1187 = vmatprep.subr.mxu0 0.0
    %1188 = vmatpush1.msra.mxu0 0.0
    %1189 = vmatprep.subr.mxu0 0.0
    %1190 = vmatpush1.msra.mxu0 0.0
    %1191 = vmatprep.subr.mxu0 0.0
    %1192 = vmatpush1.msra.mxu0 0.0
    %1193 = vmatprep.subr.mxu0 0.0
    %1194 = vmatpush1.msra.mxu0 0.0
    %1195 = vmatprep.subr.mxu0 0.0
    %1196 = vmatpush1.msra.mxu0 0.0
    %1197 = vmatprep.subr.mxu0 0.0
    %1198 = vmatpush1.msra.mxu0 0.0
    %1199 = vmatprep.subr.mxu0 0.0
    %1200 = vmatpush1.msra.mxu0 0.0
    %1201 = vmatprep.subr.mxu0 0.0
    %1202 = vmatpush1.msra.mxu0 0.0
    %1203 = vmatprep.subr.mxu0 0.0
    %1204 = vmatpush1.msra.mxu0 0.0
    %1205 = vmatprep.subr.mxu0 0.0
    %1206 = vmatpush1.msra.mxu0 0.0
    %1207 = vmatprep.subr.mxu0 0.0
    %1208 = vmatpush1.msra.mxu0 0.0
    %1209 = vmatprep.subr.mxu0 0.0
    %1210 = vmatpush1.msra.mxu0 0.0
    %1211 = vmatprep.subr.mxu0 0.0
    %1212 = vmatpush1.msra.mxu0 0.0
    %1213 = vmatprep.subr.mxu0 0.0
    %1214 = vmatpush1.msra.mxu0 0.0
    %1215 = vmatprep.subr.mxu0 0.0
    %1216 = vmatpush1.msra.mxu0 0.0
    %1217 = vmatprep.subr.mxu0 0.0
    %1218 = vmatpush1.msra.mxu0 0.0
    %1219 = vmatprep.subr.mxu0 0.0
    %1220 = vmatpush1.msra.mxu0 0.0
    %1221 = vmatprep.subr.mxu0 0.0
    %1222 = vmatpush1.msra.mxu0 0.0
    %1223 = vmatprep.subr.mxu0 0.0
    %1224 = vmatpush1.msra.mxu0 0.0
    %1225 = vmatprep.subr.mxu0 0.0
    %1226 = vmatpush1.msra.mxu0 0.0
    %1227 = vmatprep.subr.mxu0 0.0
    %1228 = vmatpush1.msra.mxu0 0.0
    %1229 = vmatprep.subr.mxu0 0.0
    %1230 = vmatpush1.msra.mxu0 0.0
    %1231 = vmatprep.subr.mxu0 0.0
    %1232 = vmatpush1.msra.mxu0 0.0
    %1233 = vmatprep.subr.mxu0 0.0
    %1234 = vmatpush1.msra.mxu0 0.0
    %1235 = vmatprep.subr.mxu0 0.0
    %1236 = vmatpush1.msra.mxu0 0.0
    %1237 = vmatprep.subr.mxu0 0.0
    %1238 = vmatpush1.msra.mxu0 0.0
    %1239 = vmatprep.subr.mxu0 0.0
    %1240 = vmatpush1.msra.mxu0 0.0
    %1241 = vmatprep.mubr.f32.mxu0 0.0
    %1242 = vmatmul.mubr.f32.gmra.mrb[0].mxu0 %v1175
    %v1243 = vpop.f32.mrb[0].mxu0
    %v1244 = vadd.f32 %v71, %v1243
    %v1245 = vpop.f32.mrb[0].mxu0
    %1246 = vdwg.mxu0
    %v1247 = vadd.f32 %v1172, %v1244
    %v1248 = vxor.u32 %v1247, 2147483648
    %v1249 = vmul.f32 %v1248, 1.442695
    %v1250 = vpow.pop %v1249
    %v1251 = vadd.f32 %v1250, 1.0
    %v1252 = vrcp.pop %v1251
    %v1253 = vmul.f32 1.0, %v1252
    %1255 = vrot.lane.b32.xlu0 %v1244, 64
    %v1256 = vpop.permute.xlu0 %1255
    %v1258 = vmul.f32 %v1253, %v1256
    %1260 = vrot.lane.b32.xlu0 %v1258, 64
    %v1261 = vpop.permute.xlu0 %1260
    %v1263 = vadd.f32 %v1172, %v1261
    %v1264 = vtanh.pop %v1263
    %v1265 = vsub.f32 %v1056, %v1264
    %1267 = vrot.lane.b32.xlu0 %v1265, 96
    %v1268 = vpop.permute.xlu0 %1267
    %v1270 = vmul.f32 %v1253, %v1268
    %1272 = vrot.lane.b32.xlu0 %v1270, 32
    %v1273 = vpop.permute.xlu0 %1272
    %v1275 = vadd.f32 %v1264, %v1273
    %v1277 = vcombine.high %v1275, %v1275
    %v1279 = vunpack.c.l.s4 1966171168
    %v1280 = vunpack.c.0.s8 %v1279
    %v1281 = vlaneseq
    %v1282 = vshrl.u32 %v1281, 7
    %v1283 = vsub.s32 %v1280, %v1282
    %v1284 = vrot.slane %v1275, %v1283
    %v1286 = vunpack.c.l.s4 1966171168
    %v1287 = vunpack.c.0.s8 %v1286
    %v1288 = vlaneseq
    %v1289 = vshrl.u32 %v1288, 7
    %v1290 = vsub.s32 %v1287, %v1289
    %v1291 = vrot.slane %v1277, %v1290
    %v1292 = vcombine.high %v1284, %v1284
    %v1293 = vcombine.high %v1291, %v1291
    %v1295 = vunpack.c.l.s4 1966171168
    %v1296 = vunpack.c.0.s8 %v1295
    %v1297 = vlaneseq
    %v1298 = vshrl.u32 %v1297, 7
    %v1299 = vsub.s32 %v1296, %v1298
    %v1300 = vrot.slane %v1284, %v1299
    %v1302 = vunpack.c.l.s4 1966171168
    %v1303 = vunpack.c.0.s8 %v1302
    %v1304 = vlaneseq
    %v1305 = vshrl.u32 %v1304, 7
    %v1306 = vsub.s32 %v1303, %v1305
    %v1307 = vrot.slane %v1291, %v1306
    %v1309 = vunpack.c.l.s4 1966171168
    %v1310 = vunpack.c.0.s8 %v1309
    %v1311 = vlaneseq
    %v1312 = vshrl.u32 %v1311, 7
    %v1313 = vsub.s32 %v1310, %v1312
    %v1314 = vrot.slane %v1292, %v1313
    %v1316 = vunpack.c.l.s4 1966171168
    %v1317 = vunpack.c.0.s8 %v1316
    %v1318 = vlaneseq
    %v1319 = vshrl.u32 %v1318, 7
    %v1320 = vsub.s32 %v1317, %v1319
    %v1321 = vrot.slane %v1293, %v1320
    %v1322 = vcombine.high %v1300, %v1300
    %v1323 = vcombine.high %v1307, %v1307
    %v1324 = vcombine.high %v1314, %v1314
    %v1325 = vcombine.high %v1321, %v1321
    %v1326 = vlaneseq
    %v1327 = vshrl.u32 %v1326, 7
    %v1328 = vsub.s32 0, %v1327
    %v1329 = vrot.slane %v1300, %v1328
    %v1330 = vlaneseq
    %v1331 = vshrl.u32 %v1330, 7
    %v1332 = vsub.s32 0, %v1331
    %v1333 = vrot.slane %v1314, %v1332
    %v1334 = vlaneseq
    %v1335 = vshrl.u32 %v1334, 7
    %v1336 = vsub.s32 0, %v1335
    %v1337 = vrot.slane %v1322, %v1336
    %v1338 = vlaneseq
    %v1339 = vshrl.u32 %v1338, 7
    %v1340 = vsub.s32 0, %v1339
    %v1341 = vrot.slane %v1324, %v1340
    %v1342 = vlaneseq
    %v1343 = vshrl.u32 %v1342, 7
    %v1344 = vsub.s32 0, %v1343
    %v1345 = vrot.slane %v1307, %v1344
    %v1346 = vlaneseq
    %v1347 = vshrl.u32 %v1346, 7
    %v1348 = vsub.s32 0, %v1347
    %v1349 = vrot.slane %v1321, %v1348
    %v1350 = vlaneseq
    %v1351 = vshrl.u32 %v1350, 7
    %v1352 = vsub.s32 0, %v1351
    %v1353 = vrot.slane %v1323, %v1352
    %v1354 = vlaneseq
    %v1355 = vshrl.u32 %v1354, 7
    %v1356 = vsub.s32 0, %v1355
    %v1357 = vrot.slane %v1325, %v1356
    %1358 = vrot.lane.b32.xlu0 %v1329, 64
    %v1359 = vpop.permute.xlu0 %1358
    %1360 = vrot.lane.b32.xlu0 %v1333, 64
    %v1361 = vpop.permute.xlu0 %1360
    %1362 = vrot.lane.b32.xlu0 %v1337, 64
    %v1363 = vpop.permute.xlu0 %1362
    %1364 = vrot.lane.b32.xlu0 %v1341, 64
    %v1365 = vpop.permute.xlu0 %1364
    %1366 = vrot.lane.b32.xlu0 %v1345, 64
    %v1367 = vpop.permute.xlu0 %1366
    %1368 = vrot.lane.b32.xlu0 %v1349, 64
    %v1369 = vpop.permute.xlu0 %1368
    %1370 = vrot.lane.b32.xlu0 %v1353, 64
    %v1371 = vpop.permute.xlu0 %1370
    %1372 = vrot.lane.b32.xlu0 %v1357, 64
    %v1373 = vpop.permute.xlu0 %1372
    %1382 = vst.msk [vmem:[#allocation8 + $0x5] sm:$0x1] %vm286, %v1359
    %1383 = vst.msk [vmem:[#allocation8 + $0xd] sm:$0x1] %vm286, %v1361
    %1384 = vst.msk [vmem:[#allocation8 + $0x15] sm:$0x1] %vm286, %v1363
    %1385 = vst.msk [vmem:[#allocation8 + $0x1d] sm:$0x1] %vm286, %v1365
    %1386 = vst.msk [vmem:[#allocation8 + $0x25] sm:$0x1] %vm286, %v1367
    %1387 = vst.msk [vmem:[#allocation8 + $0x2d] sm:$0x1] %vm286, %v1369
    %1388 = vst.msk [vmem:[#allocation8 + $0x35] sm:$0x1] %vm286, %v1371
    %1389 = vst.msk [vmem:[#allocation8 + $0x3d] sm:$0x1] %vm286, %v1373
    %s1390 = scalar_lea.vmem [#allocation2], 48
    %v1391 = vld [vmem:[%s1390] sm:$0xff]
    %1392 = vrot.lane.b32.xlu0 %v1275, 64
    %v1393 = vpop.permute.xlu0 %1392
    %v1394 = vsel %vm73, %v1393, 0
    %1396 = vmatprep.subr.mxu0 0.0
    %1397 = vmatpush1.msra.mxu0 %v60
    %1398 = vmatprep.subr.mxu0 0.0
    %1399 = vmatpush1.msra.mxu0 %v61
    %1400 = vmatprep.subr.mxu0 0.0
    %1401 = vmatpush1.msra.mxu0 %v62
    %1402 = vmatprep.subr.mxu0 0.0
    %1403 = vmatpush1.msra.mxu0 %v63
    %1404 = vmatprep.subr.mxu0 0.0
    %1405 = vmatpush1.msra.mxu0 0.0
    %1406 = vmatprep.subr.mxu0 0.0
    %1407 = vmatpush1.msra.mxu0 0.0
    %1408 = vmatprep.subr.mxu0 0.0
    %1409 = vmatpush1.msra.mxu0 0.0
    %1410 = vmatprep.subr.mxu0 0.0
    %1411 = vmatpush1.msra.mxu0 0.0
    %1412 = vmatprep.subr.mxu0 0.0
    %1413 = vmatpush1.msra.mxu0 0.0
    %1414 = vmatprep.subr.mxu0 0.0
    %1415 = vmatpush1.msra.mxu0 0.0
    %1416 = vmatprep.subr.mxu0 0.0
    %1417 = vmatpush1.msra.mxu0 0.0
    %1418 = vmatprep.subr.mxu0 0.0
    %1419 = vmatpush1.msra.mxu0 0.0
    %1420 = vmatprep.subr.mxu0 0.0
    %1421 = vmatpush1.msra.mxu0 0.0
    %1422 = vmatprep.subr.mxu0 0.0
    %1423 = vmatpush1.msra.mxu0 0.0
    %1424 = vmatprep.subr.mxu0 0.0
    %1425 = vmatpush1.msra.mxu0 0.0
    %1426 = vmatprep.subr.mxu0 0.0
    %1427 = vmatpush1.msra.mxu0 0.0
    %1428 = vmatprep.subr.mxu0 0.0
    %1429 = vmatpush1.msra.mxu0 0.0
    %1430 = vmatprep.subr.mxu0 0.0
    %1431 = vmatpush1.msra.mxu0 0.0
    %1432 = vmatprep.subr.mxu0 0.0
    %1433 = vmatpush1.msra.mxu0 0.0
    %1434 = vmatprep.subr.mxu0 0.0
    %1435 = vmatpush1.msra.mxu0 0.0
    %1436 = vmatprep.subr.mxu0 0.0
    %1437 = vmatpush1.msra.mxu0 0.0
    %1438 = vmatprep.subr.mxu0 0.0
    %1439 = vmatpush1.msra.mxu0 0.0
    %1440 = vmatprep.subr.mxu0 0.0
    %1441 = vmatpush1.msra.mxu0 0.0
    %1442 = vmatprep.subr.mxu0 0.0
    %1443 = vmatpush1.msra.mxu0 0.0
    %1444 = vmatprep.subr.mxu0 0.0
    %1445 = vmatpush1.msra.mxu0 0.0
    %1446 = vmatprep.subr.mxu0 0.0
    %1447 = vmatpush1.msra.mxu0 0.0
    %1448 = vmatprep.subr.mxu0 0.0
    %1449 = vmatpush1.msra.mxu0 0.0
    %1450 = vmatprep.subr.mxu0 0.0
    %1451 = vmatpush1.msra.mxu0 0.0
    %1452 = vmatprep.subr.mxu0 0.0
    %1453 = vmatpush1.msra.mxu0 0.0
    %1454 = vmatprep.subr.mxu0 0.0
    %1455 = vmatpush1.msra.mxu0 0.0
    %1456 = vmatprep.subr.mxu0 0.0
    %1457 = vmatpush1.msra.mxu0 0.0
    %1458 = vmatprep.subr.mxu0 0.0
    %1459 = vmatpush1.msra.mxu0 0.0
    %1460 = vmatprep.mubr.f32.mxu0 0.0
    %1461 = vmatmul.mubr.f32.gmra.mrb[0].mxu0 %v1394
    %v1462 = vpop.f32.mrb[0].mxu0
    %v1463 = vadd.f32 %v71, %v1462
    %v1464 = vpop.f32.mrb[0].mxu0
    %1465 = vdwg.mxu0
    %v1466 = vadd.f32 %v1391, %v1463
    %v1467 = vxor.u32 %v1466, 2147483648
    %v1468 = vmul.f32 %v1467, 1.442695
    %v1469 = vpow.pop %v1468
    %v1470 = vadd.f32 %v1469, 1.0
    %v1471 = vrcp.pop %v1470
    %v1472 = vmul.f32 1.0, %v1471
    %1474 = vrot.lane.b32.xlu0 %v1463, 64
    %v1475 = vpop.permute.xlu0 %1474
    %v1477 = vmul.f32 %v1472, %v1475
    %1479 = vrot.lane.b32.xlu0 %v1477, 64
    %v1480 = vpop.permute.xlu0 %1479
    %v1482 = vadd.f32 %v1391, %v1480
    %v1483 = vtanh.pop %v1482
    %v1484 = vsub.f32 %v1275, %v1483
    %1486 = vrot.lane.b32.xlu0 %v1484, 96
    %v1487 = vpop.permute.xlu0 %1486
    %v1489 = vmul.f32 %v1472, %v1487
    %1491 = vrot.lane.b32.xlu0 %v1489, 32
    %v1492 = vpop.permute.xlu0 %1491
    %v1494 = vadd.f32 %v1483, %v1492
    %v1496 = vcombine.high %v1494, %v1494
    %v1498 = vunpack.c.l.s4 1966171168
    %v1499 = vunpack.c.0.s8 %v1498
    %v1500 = vlaneseq
    %v1501 = vshrl.u32 %v1500, 7
    %v1502 = vsub.s32 %v1499, %v1501
    %v1503 = vrot.slane %v1494, %v1502
    %v1505 = vunpack.c.l.s4 1966171168
    %v1506 = vunpack.c.0.s8 %v1505
    %v1507 = vlaneseq
    %v1508 = vshrl.u32 %v1507, 7
    %v1509 = vsub.s32 %v1506, %v1508
    %v1510 = vrot.slane %v1496, %v1509
    %v1511 = vcombine.high %v1503, %v1503
    %v1512 = vcombine.high %v1510, %v1510
    %v1514 = vunpack.c.l.s4 1966171168
    %v1515 = vunpack.c.0.s8 %v1514
    %v1516 = vlaneseq
    %v1517 = vshrl.u32 %v1516, 7
    %v1518 = vsub.s32 %v1515, %v1517
    %v1519 = vrot.slane %v1503, %v1518
    %v1521 = vunpack.c.l.s4 1966171168
    %v1522 = vunpack.c.0.s8 %v1521
    %v1523 = vlaneseq
    %v1524 = vshrl.u32 %v1523, 7
    %v1525 = vsub.s32 %v1522, %v1524
    %v1526 = vrot.slane %v1510, %v1525
    %v1528 = vunpack.c.l.s4 1966171168
    %v1529 = vunpack.c.0.s8 %v1528
    %v1530 = vlaneseq
    %v1531 = vshrl.u32 %v1530, 7
    %v1532 = vsub.s32 %v1529, %v1531
    %v1533 = vrot.slane %v1511, %v1532
    %v1535 = vunpack.c.l.s4 1966171168
    %v1536 = vunpack.c.0.s8 %v1535
    %v1537 = vlaneseq
    %v1538 = vshrl.u32 %v1537, 7
    %v1539 = vsub.s32 %v1536, %v1538
    %v1540 = vrot.slane %v1512, %v1539
    %v1541 = vcombine.high %v1519, %v1519
    %v1542 = vcombine.high %v1526, %v1526
    %v1543 = vcombine.high %v1533, %v1533
    %v1544 = vcombine.high %v1540, %v1540
    %v1545 = vlaneseq
    %v1546 = vshrl.u32 %v1545, 7
    %v1547 = vsub.s32 0, %v1546
    %v1548 = vrot.slane %v1519, %v1547
    %v1549 = vlaneseq
    %v1550 = vshrl.u32 %v1549, 7
    %v1551 = vsub.s32 0, %v1550
    %v1552 = vrot.slane %v1533, %v1551
    %v1553 = vlaneseq
    %v1554 = vshrl.u32 %v1553, 7
    %v1555 = vsub.s32 0, %v1554
    %v1556 = vrot.slane %v1541, %v1555
    %v1557 = vlaneseq
    %v1558 = vshrl.u32 %v1557, 7
    %v1559 = vsub.s32 0, %v1558
    %v1560 = vrot.slane %v1543, %v1559
    %v1561 = vlaneseq
    %v1562 = vshrl.u32 %v1561, 7
    %v1563 = vsub.s32 0, %v1562
    %v1564 = vrot.slane %v1526, %v1563
    %v1565 = vlaneseq
    %v1566 = vshrl.u32 %v1565, 7
    %v1567 = vsub.s32 0, %v1566
    %v1568 = vrot.slane %v1540, %v1567
    %v1569 = vlaneseq
    %v1570 = vshrl.u32 %v1569, 7
    %v1571 = vsub.s32 0, %v1570
    %v1572 = vrot.slane %v1542, %v1571
    %v1573 = vlaneseq
    %v1574 = vshrl.u32 %v1573, 7
    %v1575 = vsub.s32 0, %v1574
    %v1576 = vrot.slane %v1544, %v1575
    %1577 = vrot.lane.b32.xlu0 %v1548, 64
    %v1578 = vpop.permute.xlu0 %1577
    %1579 = vrot.lane.b32.xlu0 %v1552, 64
    %v1580 = vpop.permute.xlu0 %1579
    %1581 = vrot.lane.b32.xlu0 %v1556, 64
    %v1582 = vpop.permute.xlu0 %1581
    %1583 = vrot.lane.b32.xlu0 %v1560, 64
    %v1584 = vpop.permute.xlu0 %1583
    %1585 = vrot.lane.b32.xlu0 %v1564, 64
    %v1586 = vpop.permute.xlu0 %1585
    %1587 = vrot.lane.b32.xlu0 %v1568, 64
    %v1588 = vpop.permute.xlu0 %1587
    %1589 = vrot.lane.b32.xlu0 %v1572, 64
    %v1590 = vpop.permute.xlu0 %1589
    %1591 = vrot.lane.b32.xlu0 %v1576, 64
    %v1592 = vpop.permute.xlu0 %1591
    %1601 = vst.msk [vmem:[#allocation8 + $0x6] sm:$0x1] %vm286, %v1578
    %1602 = vst.msk [vmem:[#allocation8 + $0xe] sm:$0x1] %vm286, %v1580
    %1603 = vst.msk [vmem:[#allocation8 + $0x16] sm:$0x1] %vm286, %v1582
    %1604 = vst.msk [vmem:[#allocation8 + $0x1e] sm:$0x1] %vm286, %v1584
    %1605 = vst.msk [vmem:[#allocation8 + $0x26] sm:$0x1] %vm286, %v1586
    %1606 = vst.msk [vmem:[#allocation8 + $0x2e] sm:$0x1] %vm286, %v1588
    %1607 = vst.msk [vmem:[#allocation8 + $0x36] sm:$0x1] %vm286, %v1590
    %1608 = vst.msk [vmem:[#allocation8 + $0x3e] sm:$0x1] %vm286, %v1592
    %s1609 = scalar_lea.vmem [#allocation2], 56
    %v1610 = vld [vmem:[%s1609] sm:$0xff]
    %1611 = vrot.lane.b32.xlu0 %v1494, 64
    %v1612 = vpop.permute.xlu0 %1611
    %v1613 = vsel %vm73, %v1612, 0
    %1615 = vmatprep.subr.mxu0 0.0
    %1616 = vmatpush1.msra.mxu0 %v60
    %1617 = vmatprep.subr.mxu0 0.0
    %1618 = vmatpush1.msra.mxu0 %v61
    %1619 = vmatprep.subr.mxu0 0.0
    %1620 = vmatpush1.msra.mxu0 %v62
    %1621 = vmatprep.subr.mxu0 0.0
    %1622 = vmatpush1.msra.mxu0 %v63
    %1623 = vmatprep.subr.mxu0 0.0
    %1624 = vmatpush1.msra.mxu0 0.0
    %1625 = vmatprep.subr.mxu0 0.0
    %1626 = vmatpush1.msra.mxu0 0.0
    %1627 = vmatprep.subr.mxu0 0.0
    %1628 = vmatpush1.msra.mxu0 0.0
    %1629 = vmatprep.subr.mxu0 0.0
    %1630 = vmatpush1.msra.mxu0 0.0
    %1631 = vmatprep.subr.mxu0 0.0
    %1632 = vmatpush1.msra.mxu0 0.0
    %1633 = vmatprep.subr.mxu0 0.0
    %1634 = vmatpush1.msra.mxu0 0.0
    %1635 = vmatprep.subr.mxu0 0.0
    %1636 = vmatpush1.msra.mxu0 0.0
    %1637 = vmatprep.subr.mxu0 0.0
    %1638 = vmatpush1.msra.mxu0 0.0
    %1639 = vmatprep.subr.mxu0 0.0
    %1640 = vmatpush1.msra.mxu0 0.0
    %1641 = vmatprep.subr.mxu0 0.0
    %1642 = vmatpush1.msra.mxu0 0.0
    %1643 = vmatprep.subr.mxu0 0.0
    %1644 = vmatpush1.msra.mxu0 0.0
    %1645 = vmatprep.subr.mxu0 0.0
    %1646 = vmatpush1.msra.mxu0 0.0
    %1647 = vmatprep.subr.mxu0 0.0
    %1648 = vmatpush1.msra.mxu0 0.0
    %1649 = vmatprep.subr.mxu0 0.0
    %1650 = vmatpush1.msra.mxu0 0.0
    %1651 = vmatprep.subr.mxu0 0.0
    %1652 = vmatpush1.msra.mxu0 0.0
    %1653 = vmatprep.subr.mxu0 0.0
    %1654 = vmatpush1.msra.mxu0 0.0
    %1655 = vmatprep.subr.mxu0 0.0
    %1656 = vmatpush1.msra.mxu0 0.0
    %1657 = vmatprep.subr.mxu0 0.0
    %1658 = vmatpush1.msra.mxu0 0.0
    %1659 = vmatprep.subr.mxu0 0.0
    %1660 = vmatpush1.msra.mxu0 0.0
    %1661 = vmatprep.subr.mxu0 0.0
    %1662 = vmatpush1.msra.mxu0 0.0
    %1663 = vmatprep.subr.mxu0 0.0
    %1664 = vmatpush1.msra.mxu0 0.0
    %1665 = vmatprep.subr.mxu0 0.0
    %1666 = vmatpush1.msra.mxu0 0.0
    %1667 = vmatprep.subr.mxu0 0.0
    %1668 = vmatpush1.msra.mxu0 0.0
    %1669 = vmatprep.subr.mxu0 0.0
    %1670 = vmatpush1.msra.mxu0 0.0
    %1671 = vmatprep.subr.mxu0 0.0
    %1672 = vmatpush1.msra.mxu0 0.0
    %1673 = vmatprep.subr.mxu0 0.0
    %1674 = vmatpush1.msra.mxu0 0.0
    %1675 = vmatprep.subr.mxu0 0.0
    %1676 = vmatpush1.msra.mxu0 0.0
    %1677 = vmatprep.subr.mxu0 0.0
    %1678 = vmatpush1.msra.mxu0 0.0
    %1679 = vmatprep.mubr.f32.mxu0 0.0
    %1680 = vmatmul.mubr.f32.gmra.mrb[0].mxu0 %v1613
    %v1681 = vpop.f32.mrb[0].mxu0
    %v1682 = vadd.f32 %v71, %v1681
    %v1683 = vpop.f32.mrb[0].mxu0
    %1684 = vdwg.mxu0
    %v1685 = vadd.f32 %v1610, %v1682
    %v1686 = vxor.u32 %v1685, 2147483648
    %v1687 = vmul.f32 %v1686, 1.442695
    %v1688 = vpow.pop %v1687
    %v1689 = vadd.f32 %v1688, 1.0
    %v1690 = vrcp.pop %v1689
    %v1691 = vmul.f32 1.0, %v1690
    %1693 = vrot.lane.b32.xlu0 %v1682, 64
    %v1694 = vpop.permute.xlu0 %1693
    %v1696 = vmul.f32 %v1691, %v1694
    %1698 = vrot.lane.b32.xlu0 %v1696, 64
    %v1699 = vpop.permute.xlu0 %1698
    %v1701 = vadd.f32 %v1610, %v1699
    %v1702 = vtanh.pop %v1701
    %v1703 = vsub.f32 %v1494, %v1702
    %1705 = vrot.lane.b32.xlu0 %v1703, 96
    %v1706 = vpop.permute.xlu0 %1705
    %v1708 = vmul.f32 %v1691, %v1706
    %1710 = vrot.lane.b32.xlu0 %v1708, 32
    %v1711 = vpop.permute.xlu0 %1710
    %v1713 = vadd.f32 %v1702, %v1711
    %v1715 = vcombine.high %v1713, %v1713
    %v1717 = vunpack.c.l.s4 1966171168
    %v1718 = vunpack.c.0.s8 %v1717
    %v1719 = vlaneseq
    %v1720 = vshrl.u32 %v1719, 7
    %v1721 = vsub.s32 %v1718, %v1720
    %v1722 = vrot.slane %v1713, %v1721
    %v1724 = vunpack.c.l.s4 1966171168
    %v1725 = vunpack.c.0.s8 %v1724
    %v1726 = vlaneseq
    %v1727 = vshrl.u32 %v1726, 7
    %v1728 = vsub.s32 %v1725, %v1727
    %v1729 = vrot.slane %v1715, %v1728
    %v1730 = vcombine.high %v1722, %v1722
    %v1731 = vcombine.high %v1729, %v1729
    %v1733 = vunpack.c.l.s4 1966171168
    %v1734 = vunpack.c.0.s8 %v1733
    %v1735 = vlaneseq
    %v1736 = vshrl.u32 %v1735, 7
    %v1737 = vsub.s32 %v1734, %v1736
    %v1738 = vrot.slane %v1722, %v1737
    %v1740 = vunpack.c.l.s4 1966171168
    %v1741 = vunpack.c.0.s8 %v1740
    %v1742 = vlaneseq
    %v1743 = vshrl.u32 %v1742, 7
    %v1744 = vsub.s32 %v1741, %v1743
    %v1745 = vrot.slane %v1729, %v1744
    %v1747 = vunpack.c.l.s4 1966171168
    %v1748 = vunpack.c.0.s8 %v1747
    %v1749 = vlaneseq
    %v1750 = vshrl.u32 %v1749, 7
    %v1751 = vsub.s32 %v1748, %v1750
    %v1752 = vrot.slane %v1730, %v1751
    %v1754 = vunpack.c.l.s4 1966171168
    %v1755 = vunpack.c.0.s8 %v1754
    %v1756 = vlaneseq
    %v1757 = vshrl.u32 %v1756, 7
    %v1758 = vsub.s32 %v1755, %v1757
    %v1759 = vrot.slane %v1731, %v1758
    %v1760 = vcombine.high %v1738, %v1738
    %v1761 = vcombine.high %v1745, %v1745
    %v1762 = vcombine.high %v1752, %v1752
    %v1763 = vcombine.high %v1759, %v1759
    %v1764 = vlaneseq
    %v1765 = vshrl.u32 %v1764, 7
    %v1766 = vsub.s32 0, %v1765
    %v1767 = vrot.slane %v1738, %v1766
    %v1768 = vlaneseq
    %v1769 = vshrl.u32 %v1768, 7
    %v1770 = vsub.s32 0, %v1769
    %v1771 = vrot.slane %v1752, %v1770
    %v1772 = vlaneseq
    %v1773 = vshrl.u32 %v1772, 7
    %v1774 = vsub.s32 0, %v1773
    %v1775 = vrot.slane %v1760, %v1774
    %v1776 = vlaneseq
    %v1777 = vshrl.u32 %v1776, 7
    %v1778 = vsub.s32 0, %v1777
    %v1779 = vrot.slane %v1762, %v1778
    %v1780 = vlaneseq
    %v1781 = vshrl.u32 %v1780, 7
    %v1782 = vsub.s32 0, %v1781
    %v1783 = vrot.slane %v1745, %v1782
    %v1784 = vlaneseq
    %v1785 = vshrl.u32 %v1784, 7
    %v1786 = vsub.s32 0, %v1785
    %v1787 = vrot.slane %v1759, %v1786
    %v1788 = vlaneseq
    %v1789 = vshrl.u32 %v1788, 7
    %v1790 = vsub.s32 0, %v1789
    %v1791 = vrot.slane %v1761, %v1790
    %v1792 = vlaneseq
    %v1793 = vshrl.u32 %v1792, 7
    %v1794 = vsub.s32 0, %v1793
    %v1795 = vrot.slane %v1763, %v1794
    %1796 = vrot.lane.b32.xlu0 %v1767, 64
    %v1797 = vpop.permute.xlu0 %1796
    %1798 = vrot.lane.b32.xlu0 %v1771, 64
    %v1799 = vpop.permute.xlu0 %1798
    %1800 = vrot.lane.b32.xlu0 %v1775, 64
    %v1801 = vpop.permute.xlu0 %1800
    %1802 = vrot.lane.b32.xlu0 %v1779, 64
    %v1803 = vpop.permute.xlu0 %1802
    %1804 = vrot.lane.b32.xlu0 %v1783, 64
    %v1805 = vpop.permute.xlu0 %1804
    %1806 = vrot.lane.b32.xlu0 %v1787, 64
    %v1807 = vpop.permute.xlu0 %1806
    %1808 = vrot.lane.b32.xlu0 %v1791, 64
    %v1809 = vpop.permute.xlu0 %1808
    %1810 = vrot.lane.b32.xlu0 %v1795, 64
    %v1811 = vpop.permute.xlu0 %1810
    %1820 = vst.msk [vmem:[#allocation8 + $0x7] sm:$0x1] %vm286, %v1797
    %1821 = vst.msk [vmem:[#allocation8 + $0xf] sm:$0x1] %vm286, %v1799
    %1822 = vst.msk [vmem:[#allocation8 + $0x17] sm:$0x1] %vm286, %v1801
    %1823 = vst.msk [vmem:[#allocation8 + $0x1f] sm:$0x1] %vm286, %v1803
    %1824 = vst.msk [vmem:[#allocation8 + $0x27] sm:$0x1] %vm286, %v1805
    %1825 = vst.msk [vmem:[#allocation8 + $0x2f] sm:$0x1] %vm286, %v1807
    %1826 = vst.msk [vmem:[#allocation8 + $0x37] sm:$0x1] %vm286, %v1809
    %1827 = vst.msk [vmem:[#allocation8 + $0x3f] sm:$0x1] %vm286, %v1811
    %1828 = vrot.lane.b32.xlu0 %v1713, 64
    %v1829 = vpop.permute.xlu0 %1828
    %1831 = vst.msk [vmem:[#allocation9] sm:$0xff] %vm73, %v1829
    // Predicated region
    $region30: #{tpu_custom_call.1} parent=1 // pred_check
      _
    $region31: #{tpu_custom_call.1} parent=1 // pred_check_branch
      %1833 = sbr.rel (0) target = $region33
    $region32: #{tpu_custom_call.1} parent=1 // pred_region
      %s1835 = ssub.s32 1024, 1024
      %1836 = vsyncadd [#allocation4], %s1835
      %s1837 = sshll.u32 [#allocation8], 4
      %s1838 = int_to_ptr.vmem [resolvable:$true] %s1837
      %1843 = dma.vmem_to_hbm [thread:$0]  %s1838, 1024, %s4, [#allocation4], 128, 128, 8
    $region33: #{tpu_custom_call.1} parent=1 // pred_fallthru
      _
    // Predicated region
    $region34: #{tpu_custom_call.1} parent=1 // pred_check
      _
    $region35: #{tpu_custom_call.1} parent=1 // pred_check_branch
      %1845 = sbr.rel (0) target = $region37
    $region36: #{tpu_custom_call.1} parent=1 // pred_region
      %s1847 = ssub.s32 128, 128
      %1848 = vsyncadd [#allocation10], %s1847
      %s1850 = sshll.u32 [#allocation9], 4
      %s1851 = int_to_ptr.vmem [resolvable:$true] %s1850
      %1853 = dma.vmem_to_hbm [thread:$0]  %s1851, 128, %s5, [#allocation10]
    $region37: #{tpu_custom_call.1} parent=1 // pred_fallthru
      _
    // Predicated region
    $region38: #{tpu_custom_call.1} parent=1 // pred_check
      _
    $region39: #{tpu_custom_call.1} parent=1 // pred_check_branch
      %1855 = sbr.rel (0) target = $region41
    $region40: #{tpu_custom_call.1} parent=1 // pred_region
      %1856 = dma.done [#allocation4], 1024
    $region41: #{tpu_custom_call.1} parent=1 // pred_fallthru
      _
    // Predicated region
    $region42: #{tpu_custom_call.1} parent=1 // pred_check
      _
    $region43: #{tpu_custom_call.1} parent=1 // pred_check_branch
      %1858 = sbr.rel (0) target = $region45
    $region44: #{tpu_custom_call.1} parent=1 // pred_region
      %1859 = dma.done [#allocation10], 128
    $region45: #{tpu_custom_call.1} parent=1 // pred_fallthru
      _
    %1860 = vsyncpa [#allocation3], 1
    %1861 = vsyncpa [#allocation6], 1
    %1862 = vsyncpa [#allocation4], 1
    %1863 = vsyncpa [#allocation10], 1

</llo_original>
